<compile_context>
chip_gen: v7x
topology: tpu7x:2x2x1
jax: 0.10.0
libtpu: 0.0.40
codegen_flags: <defaults>
</compile_context>

<pallas_src>
import functools

import jax
import jax.numpy as jnp
from jax.experimental import pallas as pl
from jax.experimental.pallas import tpu as pltpu


def _round_up(x, m):
    return (x + m - 1) // m * m


def _pick_spatial_tile(hw, cap):
    """Largest multiple-of-8 tile <= cap, preferring one that divides hw exactly."""
    hw_ceil = _round_up(hw, 8)
    cap = max(8, (min(cap, hw_ceil) // 8) * 8)
    best = 0
    for t in range(8, cap + 1, 8):
        if hw % t == 0:
            best = t
    return best if best > 0 else cap


def _silu(x):
    # x * sigmoid(x) == 0.5*x*tanh(0.5*x) + 0.5*x : one EUP push per vreg
    # instead of exp + reciprocal.
    h = x * 0.5
    return h * jnp.tanh(h) + h


# ----------------------------------------------------------------------------
# Fused Pallas kernel: stem conv -> head conv -> global avg pool -> classifier
# ----------------------------------------------------------------------------
def _fused_kernel(cols_ref, ws_ref, wh_ref, bh_ref, wc_ref, bc_ref,
                  out_ref, acc_ref, *, hw, t_hw, bf16_elementwise):
    """One (batch b, spatial tile s) grid step.

    cols_ref: (t_hw, Kp) bf16   im2col rows (+ ones bias lane) of the stem conv
    ws:       (Kp, Cs)   bf16   stem weight with b_stem folded into the bias row
    wh/bh:    (Cs, Ch) bf16 / (1, Ch) f32   head weight / bias
    wc/bc:    (Ch, Np) bf16 / (1, Np) f32   classifier weight / bias, Np = pad(53->128)
    out_ref:  (8, Np)  f32      logits (row 0 is the valid row)
    acc_ref:  (8, Ch)  f32 VMEM running sublane-partial spatial sums of head features
    """
    s = pl.program_id(1)
    n_s = pl.num_programs(1)
    ch = acc_ref.shape[-1]

    @pl.when(s == 0)
    def _():
        acc_ref[...] = jnp.zeros_like(acc_ref)

    # stem conv (im2col rows): (t_hw, Kp) @ (Kp, Cs) -> f32; bias rides in the ones lane.
    stem = jnp.dot(cols_ref[...], ws_ref[...], preferred_element_type=jnp.float32)
    stem = _silu(stem)

    # head 1x1 conv: (t_hw, Cs) @ (Cs, Ch) -> f32 out of the MXU.
    head = jnp.dot(stem.astype(jnp.bfloat16), wh_ref[...],
                   preferred_element_type=jnp.float32)
    if bf16_elementwise:
        # bf16 VPU/EUP path (v6e/v7x): halves vreg count of the dominant elementwise phase.
        head = _silu(head.astype(jnp.bfloat16) + bh_ref[...].astype(jnp.bfloat16))
    else:
        head = _silu(head + bh_ref[...])

    def _accumulate(h):
        # Reduce (t_hw, Ch) only to 8 sublane-partial rows: pure vreg-wise f32 adds,
        # dense (8,128) stores into the accumulator, no per-step cross-sublane XLU work.
        h32 = h.astype(jnp.float32).reshape(t_hw // 8, 8, ch)
        acc_ref[...] += jnp.sum(h32, axis=0)

    if hw % t_hw == 0:
        _accumulate(head)               # common case: no pad rows, no mask at all
    else:
        # Pad rows only exist in the LAST spatial tile; mask only there (covers n_s == 1).
        @pl.when(s != n_s - 1)
        def _():
            _accumulate(head)

        @pl.when(s == n_s - 1)
        def _():
            row = jax.lax.broadcasted_iota(jnp.int32, (t_hw, 1), 0) + s * t_hw
            _accumulate(jnp.where(row < hw, head.astype(jnp.float32), 0.0))

    @pl.when(s == n_s - 1)
    def _():
        pooled = acc_ref[...] * (1.0 / hw)                       # (8, Ch) partial rows
        # Classifier is linear: run it on the 8 partial rows, reduce 8->1 afterwards
        # (avoids the old sublane broadcast of a 1-row pooled vector).
        rows = jnp.dot(pooled.astype(jnp.bfloat16), wc_ref[...],
                       preferred_element_type=jnp.float32)        # (8, Np)
        logits = jnp.sum(rows, axis=0, keepdims=True) + bc_ref[...]
        out_ref[...] = jnp.broadcast_to(logits, out_ref.shape).astype(out_ref.dtype)


def fused_feature_classifier(cols, w_stem, w_head, b_head, w_cls, b_cls,
                             *, t_hw_cap=1024, bf16_elementwise=True):
    """cols: (B, HW, Kp) bf16 -> padded logits (B, 8, Np) f32 (row 0 valid)."""
    B, HW, Kp = cols.shape
    Cs = w_stem.shape[1]
    Ch = w_head.shape[1]
    Np = w_cls.shape[1]

    # Spatial tile: multiple of 8, preferring an exact divisor of HW so no pad rows are
    # ever fed to the MXU.  Cap 1024 keeps per-step temps (~6 MB f32+bf16 head block)
    # comfortably inside the 32 MiB scoped VMEM we request below on every generation.
    t_hw = _pick_spatial_tile(HW, t_hw_cap)
    HWp = _round_up(HW, t_hw)
    if HWp != HW:
        cols = jnp.pad(cols, ((0, 0), (0, HWp - HW), (0, 0)))
    n_s = HWp // t_hw

    b_head = b_head.astype(jnp.float32)
    b_cls = b_cls.astype(jnp.float32)

    cost = pl.CostEstimate(
        flops=int(2 * B * HWp * (Kp * Cs + Cs * Ch) + 2 * B * 8 * Ch * Np),
        transcendentals=int(B * HWp * (Cs + Ch)),
        bytes_accessed=int(B * HWp * Kp * 2
                           + (Kp * Cs + Cs * Ch + Ch * Np) * 2
                           + (Ch + Np) * 4 + B * 8 * Np * 4),
    )

    kernel = functools.partial(_fused_kernel, hw=HW, t_hw=t_hw,
                               bf16_elementwise=bf16_elementwise)
    # Note: constant-index_map weight blocks are still double-buffered by default; on v7x
    # (64 MiB VMEM) this costs <1 MB and is acceptable at t_hw <= 2048.
    return pl.pallas_call(
        kernel,
        out_shape=jax.ShapeDtypeStruct((B, 8, Np), jnp.float32),
        grid=(B, n_s),
        in_specs=[
            pl.BlockSpec((None, t_hw, Kp), lambda b, s: (b, s, 0)),   # im2col rows
            pl.BlockSpec((Kp, Cs), lambda b, s: (0, 0)),              # w_stem (+bias row)
            pl.BlockSpec((Cs, Ch), lambda b, s: (0, 0)),              # w_head
            pl.BlockSpec((1, Ch), lambda b, s: (0, 0)),               # b_head
            pl.BlockSpec((Ch, Np), lambda b, s: (0, 0)),              # w_cls
            pl.BlockSpec((1, Np), lambda b, s: (0, 0)),               # b_cls
        ],
        out_specs=pl.BlockSpec((None, 8, Np), lambda b, s: (b, 0, 0)),
        scratch_shapes=[pltpu.VMEM((8, Ch), jnp.float32)],
        compiler_params=pltpu.CompilerParams(
            dimension_semantics=("parallel", "arbitrary"),
            vmem_limit_bytes=32 * 1024 * 1024),   # raises v5e's 16 MiB scoped default
        cost_estimate=cost,
    )(cols, w_stem, w_head, b_head, w_cls, b_cls)


# ----------------------------------------------------------------------------
# JAX glue (layout / im2col / parameter setup)
# ----------------------------------------------------------------------------
def im2col_3x3_s2_p1(x_nhwc):
    """3x3, stride-2, pad-1 patches. K ordering is (kh, kw, cin)."""
    Nb, H, W, C = x_nhwc.shape
    xp = jnp.pad(x_nhwc, ((0, 0), (1, 1), (1, 1), (0, 0)))
    Ho, Wo = H // 2, W // 2
    patches = []
    for i in range(3):
        for j in range(3):
            patches.append(xp[:, i:i + 2 * Ho:2, j:j + 2 * Wo:2, :])  # (Nb, Ho, Wo, C)
    cols = jnp.stack(patches, axis=3)                                 # (Nb, Ho, Wo, 9, C)
    return cols.reshape(Nb, Ho * Wo, 9 * C), Ho, Wo


def init_params(key, num_classes=53, in_ch=3, stem_out=32, enet_out=1280):
    """Deterministic synthetic parameters (BN folded into conv weight/bias)."""
    k1, k2, k3, k4 = jax.random.split(key, 4)
    return {
        # conv_stem: (kh*kw*cin, cout), K order matches im2col above
        "w_stem": jax.random.normal(k1, (9 * in_ch, stem_out), jnp.float32) * 0.1,
        "b_stem": jnp.zeros((stem_out,), jnp.float32),
        # conv_head (1x1): (cin, 1280)
        "w_head": jax.random.normal(k2, (stem_out, enet_out), jnp.float32) * 0.05,
        "b_head": jnp.zeros((enet_out,), jnp.float32),
        # classifier: Linear(1280, num_classes)
        "w_cls": jax.random.normal(k3, (enet_out, num_classes), jnp.float32) * 0.02,
        "b_cls": jax.random.normal(k4, (num_classes,), jnp.float32) * 0.01,
    }


def simple_card_classifier_forward(x_nchw, params, *, t_hw_cap=1024,
                                   bf16_elementwise=True):
    """Equivalent of SimpleCardClassifier.forward: x -> features(x) -> classifier.

    Set bf16_elementwise=False on v5e (no bf16 VPU/EUP).  On v7x keep batch a multiple
    of 2 per chip so the "parallel" batch grid axis occupies both TensorCores.
    """
    num_classes = params["b_cls"].shape[0]
    x = jnp.transpose(x_nchw, (0, 2, 3, 1)).astype(jnp.float32)      # NCHW -> NHWC
    cols, _, _ = im2col_3x3_s2_p1(x)                                  # (B, HW, 27)

    B, HW, K = cols.shape
    Kp = _round_up(K + 1, 8)                # 27 (+1 bias lane) -> 32
    Np = _round_up(num_classes, 128)        # 53 -> 128 (lane-dense stores)

    # Append a constant-1 bias lane and zero-pad K -> Kp; b_stem rides through the MXU
    # in the matching row of w_stem (no in-kernel stem-bias add, one fewer operand).
    ones = jnp.ones((B, HW, 1), jnp.float32)
    cols = jnp.concatenate([cols, ones], axis=-1)
    cols = jnp.pad(cols, ((0, 0), (0, 0), (0, Kp - (K + 1)))).astype(jnp.bfloat16)

    w_stem = jnp.concatenate([params["w_stem"], params["b_stem"][None, :]], axis=0)
    w_stem = jnp.pad(w_stem, ((0, Kp - (K + 1)), (0, 0))).astype(jnp.bfloat16)

    w_head = params["w_head"].astype(jnp.bfloat16)
    b_head = params["b_head"].reshape(1, -1).astype(jnp.float32)
    w_cls = jnp.pad(params["w_cls"],
                    ((0, 0), (0, Np - num_classes))).astype(jnp.bfloat16)
    b_cls = jnp.pad(params["b_cls"],
                    ((0, Np - num_classes),)).reshape(1, -1).astype(jnp.float32)

    out = fused_feature_classifier(cols, w_stem, w_head, b_head, w_cls, b_cls,
                                   t_hw_cap=t_hw_cap,
                                   bf16_elementwise=bf16_elementwise)  # (B, 8, Np)
    return out[:, 0, :num_classes]                                     # (B, num_classes)


if __name__ == "__main__":
    key = jax.random.PRNGKey(0)
    k_x, k_p = jax.random.split(key)
    x = jax.random.normal(k_x, (2, 3, 16, 16), jnp.float32)            # NCHW like PyTorch
    params = init_params(k_p, num_classes=53)

    fwd = jax.jit(simple_card_classifier_forward)
    logits = fwd(x, params)
    jax.block_until_ready(logits)

    assert logits.shape == (2, 53), logits.shape
    assert bool(jnp.all(jnp.isfinite(logits)))
    print("KERNEL_OK")
</pallas_src>

<mosaic_0001>
module attributes {stable_mosaic.version = 11 : i64} {
  func.func @_fused_kernel(%arg0: i32, %arg1: i32, %arg2: memref<1x64x32xbf16, #tpu.memory_space<vmem>>, %arg3: memref<32x32xbf16, #tpu.memory_space<vmem>>, %arg4: memref<32x1280xbf16, #tpu.memory_space<vmem>>, %arg5: memref<1x1280xf32, #tpu.memory_space<vmem>>, %arg6: memref<1280x128xbf16, #tpu.memory_space<vmem>>, %arg7: memref<1x128xf32, #tpu.memory_space<vmem>>, %arg8: memref<1x8x128xf32, #tpu.memory_space<vmem>>, %arg9: memref<8x1280xf32, #tpu.memory_space<vmem>>) attributes {dimension_semantics = [#tpu.dimension_semantics<parallel>, #tpu.dimension_semantics<arbitrary>], iteration_bounds = array<i64: 2, 1>, scalar_prefetch = 0 : i64, scratch_operands = 1 : i64, tpu.core_type = #tpu.core_type<tc>, window_params = [{transform_indices = @transform_0, window_bounds = array<i64: 1, 64, 32>}, {pipeline_mode = #tpu.pipeline_mode<synchronous>, transform_indices = @transform_1, window_bounds = array<i64: 32, 32>}, {pipeline_mode = #tpu.pipeline_mode<synchronous>, transform_indices = @transform_2, window_bounds = array<i64: 32, 1280>}, {pipeline_mode = #tpu.pipeline_mode<synchronous>, transform_indices = @transform_3, window_bounds = array<i64: 1, 1280>}, {pipeline_mode = #tpu.pipeline_mode<synchronous>, transform_indices = @transform_4, window_bounds = array<i64: 1280, 128>}, {pipeline_mode = #tpu.pipeline_mode<synchronous>, transform_indices = @transform_5, window_bounds = array<i64: 1, 128>}, {transform_indices = @transform_6, window_bounds = array<i64: 1, 8, 128>}]} {
    %c0_i32 = arith.constant 0 : i32
    %0 = arith.cmpi eq, %arg1, %c0_i32 : i32
    %1 = arith.extui %0 : i1 to i32
    %c0_i32_0 = arith.constant 0 : i32
    %2 = arith.cmpi ne, %1, %c0_i32_0 : i32
    scf.if %2 {
      %cst_19 = arith.constant 0.000000e+00 : f32
      %34 = vector.broadcast %cst_19 : f32 to vector<8x1280xf32>
      %c0_20 = arith.constant 0 : index
      %c0_21 = arith.constant 0 : index
      %35 = vector.load %arg9[%c0_20, %c0_21] : memref<8x1280xf32, #tpu.memory_space<vmem>>, vector<8x1280xf32>
      tpu.vector_store %arg9[%c0_20, %c0_21], %34 {strides = array<i32>} : memref<8x1280xf32, #tpu.memory_space<vmem>>, vector<8x1280xf32>,
    } else {
    }
    %c0 = arith.constant 0 : index
    %c0_1 = arith.constant 0 : index
    %c0_2 = arith.constant 0 : index
    %3 = vector.load %arg2[%c0, %c0_1, %c0_2] : memref<1x64x32xbf16, #tpu.memory_space<vmem>>, vector<1x64x32xbf16>
    %4 = vector.shape_cast %3 : vector<1x64x32xbf16> to vector<64x32xbf16>
    %c0_3 = arith.constant 0 : index
    %c0_4 = arith.constant 0 : index
    %5 = vector.load %arg3[%c0_3, %c0_4] : memref<32x32xbf16, #tpu.memory_space<vmem>>, vector<32x32xbf16>
    %cst = arith.constant dense<0.000000e+00> : vector<64x32xf32>
    %6 = tpu.matmul %4, %5, %cst {dimension_numbers = #tpu.dot_dimension_numbers<[1], [0], [0], [1], [0, 0, 1, 1], [], []>} : vector<64x32xbf16>, vector<32x32xbf16>, vector<64x32xf32> -> vector<64x32xf32>
    %cst_5 = arith.constant 5.000000e-01 : f32
    %7 = vector.broadcast %cst_5 : f32 to vector<64x32xf32>
    %8 = arith.mulf %6, %7 : vector<64x32xf32>
    %9 = math.tanh %8 : vector<64x32xf32>
    %10 = arith.mulf %8, %9 : vector<64x32xf32>
    %11 = arith.addf %10, %8 : vector<64x32xf32>
    %12 = arith.truncf %11 : vector<64x32xf32> to vector<64x32xbf16>
    %c0_6 = arith.constant 0 : index
    %c0_7 = arith.constant 0 : index
    %13 = vector.load %arg4[%c0_6, %c0_7] : memref<32x1280xbf16, #tpu.memory_space<vmem>>, vector<32x1280xbf16>
    %cst_8 = arith.constant dense<0.000000e+00> : vector<64x1280xf32>
    %14 = tpu.matmul %12, %13, %cst_8 {dimension_numbers = #tpu.dot_dimension_numbers<[1], [0], [0], [1], [0, 0, 1, 1], [], []>} : vector<64x32xbf16>, vector<32x1280xbf16>, vector<64x1280xf32> -> vector<64x1280xf32>
    %15 = arith.truncf %14 : vector<64x1280xf32> to vector<64x1280xbf16>
    %c0_9 = arith.constant 0 : index
    %c0_10 = arith.constant 0 : index
    %16 = vector.load %arg5[%c0_9, %c0_10] : memref<1x1280xf32, #tpu.memory_space<vmem>>, vector<1x1280xf32>
    %17 = arith.truncf %16 : vector<1x1280xf32> to vector<1x1280xbf16>
    %18 = vector.broadcast %17 : vector<1x1280xbf16> to vector<64x1280xbf16>
    %19 = arith.addf %15, %18 : vector<64x1280xbf16>
    %cst_11 = arith.constant 5.000000e-01 : bf16
    %20 = vector.broadcast %cst_11 : bf16 to vector<64x1280xbf16>
    %21 = arith.mulf %19, %20 : vector<64x1280xbf16>
    %22 = math.tanh %21 : vector<64x1280xbf16>
    %23 = arith.mulf %21, %22 : vector<64x1280xbf16>
    %24 = arith.addf %23, %21 : vector<64x1280xbf16>
    %25 = arith.extf %24 : vector<64x1280xbf16> to vector<64x1280xf32>
    %26 = vector.shape_cast %25 : vector<64x1280xf32> to vector<8x8x1280xf32>
    %c0_12 = arith.constant 0 : index
    %c0_13 = arith.constant 0 : index
    %27 = vector.load %arg9[%c0_12, %c0_13] : memref<8x1280xf32, #tpu.memory_space<vmem>>, vector<8x1280xf32>
    %cst_14 = arith.constant dense<0.000000e+00> : vector<8x1280xf32>
    %28 = vector.multi_reduction <add>, %26, %cst_14 [0] : vector<8x8x1280xf32> to vector<8x1280xf32>
    %29 = arith.addf %27, %28 : vector<8x1280xf32>
    %c0_15 = arith.constant 0 : index
    %c0_16 = arith.constant 0 : index
    %30 = vector.load %arg9[%c0_15, %c0_16] : memref<8x1280xf32, #tpu.memory_space<vmem>>, vector<8x1280xf32>
    tpu.vector_store %arg9[%c0_15, %c0_16], %29 {strides = array<i32>} : memref<8x1280xf32, #tpu.memory_space<vmem>>, vector<8x1280xf32>,
    %c0_i32_17 = arith.constant 0 : i32
    %31 = arith.cmpi eq, %arg1, %c0_i32_17 : i32
    %32 = arith.extui %31 : i1 to i32
    %c0_i32_18 = arith.constant 0 : i32
    %33 = arith.cmpi ne, %32, %c0_i32_18 : i32
    scf.if %33 {
      %c0_19 = arith.constant 0 : index
      %c0_20 = arith.constant 0 : index
      %34 = vector.load %arg9[%c0_19, %c0_20] : memref<8x1280xf32, #tpu.memory_space<vmem>>, vector<8x1280xf32>
      %cst_21 = arith.constant 1.562500e-02 : f32
      %35 = vector.broadcast %cst_21 : f32 to vector<8x1280xf32>
      %36 = arith.mulf %34, %35 : vector<8x1280xf32>
      %37 = arith.truncf %36 : vector<8x1280xf32> to vector<8x1280xbf16>
      %c0_22 = arith.constant 0 : index
      %c0_23 = arith.constant 0 : index
      %38 = vector.load %arg6[%c0_22, %c0_23] : memref<1280x128xbf16, #tpu.memory_space<vmem>>, vector<1280x128xbf16>
      %cst_24 = arith.constant dense<0.000000e+00> : vector<8x128xf32>
      %39 = tpu.matmul %37, %38, %cst_24 {dimension_numbers = #tpu.dot_dimension_numbers<[1], [0], [0], [1], [0, 0, 1, 1], [], []>} : vector<8x1280xbf16>, vector<1280x128xbf16>, vector<8x128xf32> -> vector<8x128xf32>
      %cst_25 = arith.constant dense<0.000000e+00> : vector<128xf32>
      %40 = vector.multi_reduction <add>, %39, %cst_25 [0] : vector<8x128xf32> to vector<128xf32>
      %41 = vector.shape_cast %40 : vector<128xf32> to vector<1x128xf32>
      %c0_26 = arith.constant 0 : index
      %c0_27 = arith.constant 0 : index
      %42 = vector.load %arg7[%c0_26, %c0_27] : memref<1x128xf32, #tpu.memory_space<vmem>>, vector<1x128xf32>
      %43 = arith.addf %41, %42 : vector<1x128xf32>
      %44 = vector.shape_cast %43 : vector<1x128xf32> to vector<1x128xf32>
      %45 = vector.broadcast %44 : vector<1x128xf32> to vector<8x128xf32>
      %c0_28 = arith.constant 0 : index
      %c0_29 = arith.constant 0 : index
      %c0_30 = arith.constant 0 : index
      %46 = vector.load %arg8[%c0_28, %c0_29, %c0_30] : memref<1x8x128xf32, #tpu.memory_space<vmem>>, vector<1x8x128xf32>
      %47 = vector.shape_cast %46 : vector<1x8x128xf32> to vector<8x128xf32>
      %48 = vector.shape_cast %45 : vector<8x128xf32> to vector<1x8x128xf32>
      tpu.vector_store %arg8[%c0_28, %c0_29, %c0_30], %48 {strides = array<i32>} : memref<1x8x128xf32, #tpu.memory_space<vmem>>, vector<1x8x128xf32>,
    } else {
    }
    return
  }
  func.func @transform_0(%arg0: i32, %arg1: i32) -> (i32, i32, i32) {
    %c0_i32 = arith.constant 0 : i32
    %c0_i32_0 = arith.constant 0 : i32
    return %arg0, %arg1, %c0_i32 : i32, i32, i32
  }
  func.func @transform_1(%arg0: i32, %arg1: i32) -> (i32, i32) {
    %c0_i32 = arith.constant 0 : i32
    %c0_i32_0 = arith.constant 0 : i32
    %c0_i32_1 = arith.constant 0 : i32
    return %c0_i32, %c0_i32_0 : i32, i32
  }
  func.func @transform_2(%arg0: i32, %arg1: i32) -> (i32, i32) {
    %c0_i32 = arith.constant 0 : i32
    %c0_i32_0 = arith.constant 0 : i32
    %c0_i32_1 = arith.constant 0 : i32
    return %c0_i32, %c0_i32_0 : i32, i32
  }
  func.func @transform_3(%arg0: i32, %arg1: i32) -> (i32, i32) {
    %c0_i32 = arith.constant 0 : i32
    %c0_i32_0 = arith.constant 0 : i32
    %c0_i32_1 = arith.constant 0 : i32
    return %c0_i32, %c0_i32_0 : i32, i32
  }
  func.func @transform_4(%arg0: i32, %arg1: i32) -> (i32, i32) {
    %c0_i32 = arith.constant 0 : i32
    %c0_i32_0 = arith.constant 0 : i32
    %c0_i32_1 = arith.constant 0 : i32
    return %c0_i32, %c0_i32_0 : i32, i32
  }
  func.func @transform_5(%arg0: i32, %arg1: i32) -> (i32, i32) {
    %c0_i32 = arith.constant 0 : i32
    %c0_i32_0 = arith.constant 0 : i32
    %c0_i32_1 = arith.constant 0 : i32
    return %c0_i32, %c0_i32_0 : i32, i32
  }
  func.func @transform_6(%arg0: i32, %arg1: i32) -> (i32, i32, i32) {
    %c0_i32 = arith.constant 0 : i32
    %c0_i32_0 = arith.constant 0 : i32
    %c0_i32_1 = arith.constant 0 : i32
    return %arg0, %c0_i32, %c0_i32_0 : i32, i32, i32
  }
}

</mosaic_0001>

<llo_original>
// kernel: simple_card_classifier_forward.1
$region0: #{simple_card_classifier_forward.1}
  #allocation0 [shape = 'u32[]', space=smem, size = 0x4, offset = 0x4, fixed_abs, tag = 'smem constant byte address 0x4 - core index']
  #allocation1 [shape = 'u32[144,128]{1,0:T(1,128)}', space=vmem, size = 0x12000, scoped, tag = 'internal scratch']
  #allocation2 [shape = 'f32[8,1280]{1,0:T(8,128)}', space=vmem, size = 0xa000, scoped, tag = 'scratch operand']
  %s0 = inlined_call_operand.vmem [shape: bf16[2,64,32], index: 0, kind: input, shape index: {}]
  %s1 = inlined_call_operand.vmem [shape: bf16[32,32], index: 1, kind: input, shape index: {}]
  %s2 = inlined_call_operand.vmem [shape: bf16[32,1280], index: 2, kind: input, shape index: {}]
  %s3 = inlined_call_operand.vmem [shape: f32[1,1280], index: 3, kind: input, shape index: {}]
  %s4 = inlined_call_operand.vmem [shape: bf16[1280,128], index: 4, kind: input, shape index: {}]
  %s5 = inlined_call_operand.vmem [shape: f32[1,128], index: 5, kind: input, shape index: {}]
  %s6 = inlined_call_operand.vmem [shape: f32[2,8,128], index: 6, kind: output, shape index: {}]
  %s7 = sld [smem:[#allocation0]]
  $region65: #{simple_card_classifier_forward.1} parent=0
    _
  %s9 = ssub.s32 1, %s7
  %s10 = scalar_select 0, %s9, %s7
  loop: start=0, step=1, limit=4
  $region2: #{simple_card_classifier_forward.1} parent=0 // loop_pre_header
    _
  $region3: #{simple_card_classifier_forward.1} parent=0 // loop_header
    %s12 = sphi 0, %s16
    %p13 = scmp.ge.s32.totalorder %s12, 4
    %s19 = sphi 0, %s31
    %s20 = sphi 0, %s27
    %s21 = sphi 0, %s19
    %s22 = sphi 0, %s20
    %s23 = sphi 0, %s21
    %s24 = sphi 0, %s22
    %s36 = sphi 0, %s38
    %s39 = sphi 0, %s36
    %s40 = sphi 0, %s39
    %s56 = sphi 0, %s40
    %s60 = sphi 0, %s60
    %s62 = sphi 0, %s60
    %s63 = sphi 0, %s62
    %s77 = sphi 0, %s63
    %s81 = sphi 0, %s81
    %s83 = sphi 0, %s81
    %s84 = sphi 0, %s83
    %s98 = sphi 0, %s84
    %s102 = sphi 0, %s102
    %s104 = sphi 0, %s102
    %s105 = sphi 0, %s104
    %s119 = sphi 0, %s105
    %s123 = sphi 0, %s123
    %s125 = sphi 0, %s123
    %s126 = sphi 0, %s125
    %s140 = sphi 0, %s126
    %s144 = sphi 0, %s144
    %s146 = sphi 0, %s144
    %s147 = sphi 0, %s146
    %s161 = sphi 0, %s147
    %s167 = sphi 0, %s169
    %s170 = sphi 0, %s167
    %s171 = sphi 0, %s170
    %s187 = sphi 0, %s171
  $region4: #{simple_card_classifier_forward.1} parent=0 // loop_header_branch
    %15 = sbr.rel (%p13) target = $region8
  $region5: #{simple_card_classifier_forward.1} parent=0 // loop_body
    %s17 = ssub.s32 %s12, 1
    %s18 = ssub.s32 %s12, 2
    %s25 = sadd.s32 1, %s20
    %p26 = scmp.ge.s32.totalorder %s25, 1
    %s27 = scalar_select %p26, 0, %s25
    %s28 = sadd.s32 1, %s19
    %s29 = scalar_select %p26, %s28, %s19
    %p30 = scmp.ge.s32.totalorder %s29, 2
    %s31 = scalar_select %p30, 0, %s29
    %s32 = ssub.s32 %s19, %s31
    %s33 = ssub.s32 %s20, %s27
    %s34 = sor.u32 %s32, %s33
    %p35 = scmp.eq.s32.totalorder %s34, 0
    %s37 = sadd.s32 %s36, 1
    %s38 = scalar_select %p35, %s36, %s37
    %p41 = pneg %p35
    %p42 = scmp.eq.s32.totalorder %s12, 1
    %p43 = por %p41, %p42
    %p44 = scmp.ne.s32.totalorder %s36, %s39
    %p45 = scmp.eq.s32.totalorder %s12, 0
    %p46 = por %p44, %p45
    %p47 = scmp.ne.s32.totalorder %s36, %s39
    %p48 = scmp.eq.s32.totalorder %s17, 1
    %p49 = por %p47, %p48
    %p50 = scmp.ne.s32.totalorder %s39, %s40
    %p51 = scmp.eq.s32.totalorder %s17, 0
    %p52 = por %p50, %p51
    %p53 = scmp.ne.s32.totalorder %s39, %s40
    %p54 = scmp.eq.s32.totalorder %s18, 1
    %p55 = por %p53, %p54
    %p57 = scmp.ne.s32.totalorder %s40, %s56
    %p58 = scmp.eq.s32.totalorder %s18, 0
    %p59 = por %p57, %p58
    %s61 = sadd.s32 %s60, 1
    %p64 = scmp.eq.s32.totalorder %s12, 1
    %p65 = scmp.ne.s32.totalorder %s60, %s62
    %p66 = scmp.eq.s32.totalorder %s12, 0
    %p67 = por %p65, %p66
    %p68 = scmp.ne.s32.totalorder %s60, %s62
    %p69 = scmp.eq.s32.totalorder %s17, 1
    %p70 = por %p68, %p69
    %p71 = scmp.ne.s32.totalorder %s62, %s63
    %p72 = scmp.eq.s32.totalorder %s17, 0
    %p73 = por %p71, %p72
    %p74 = scmp.ne.s32.totalorder %s62, %s63
    %p75 = scmp.eq.s32.totalorder %s18, 1
    %p76 = por %p74, %p75
    %p78 = scmp.ne.s32.totalorder %s63, %s77
    %p79 = scmp.eq.s32.totalorder %s18, 0
    %p80 = por %p78, %p79
    %s82 = sadd.s32 %s81, 1
    %p85 = scmp.eq.s32.totalorder %s12, 1
    %p86 = scmp.ne.s32.totalorder %s81, %s83
    %p87 = scmp.eq.s32.totalorder %s12, 0
    %p88 = por %p86, %p87
    %p89 = scmp.ne.s32.totalorder %s81, %s83
    %p90 = scmp.eq.s32.totalorder %s17, 1
    %p91 = por %p89, %p90
    %p92 = scmp.ne.s32.totalorder %s83, %s84
    %p93 = scmp.eq.s32.totalorder %s17, 0
    %p94 = por %p92, %p93
    %p95 = scmp.ne.s32.totalorder %s83, %s84
    %p96 = scmp.eq.s32.totalorder %s18, 1
    %p97 = por %p95, %p96
    %p99 = scmp.ne.s32.totalorder %s84, %s98
    %p100 = scmp.eq.s32.totalorder %s18, 0
    %p101 = por %p99, %p100
    %s103 = sadd.s32 %s102, 1
    %p106 = scmp.eq.s32.totalorder %s12, 1
    %p107 = scmp.ne.s32.totalorder %s102, %s104
    %p108 = scmp.eq.s32.totalorder %s12, 0
    %p109 = por %p107, %p108
    %p110 = scmp.ne.s32.totalorder %s102, %s104
    %p111 = scmp.eq.s32.totalorder %s17, 1
    %p112 = por %p110, %p111
    %p113 = scmp.ne.s32.totalorder %s104, %s105
    %p114 = scmp.eq.s32.totalorder %s17, 0
    %p115 = por %p113, %p114
    %p116 = scmp.ne.s32.totalorder %s104, %s105
    %p117 = scmp.eq.s32.totalorder %s18, 1
    %p118 = por %p116, %p117
    %p120 = scmp.ne.s32.totalorder %s105, %s119
    %p121 = scmp.eq.s32.totalorder %s18, 0
    %p122 = por %p120, %p121
    %s124 = sadd.s32 %s123, 1
    %p127 = scmp.eq.s32.totalorder %s12, 1
    %p128 = scmp.ne.s32.totalorder %s123, %s125
    %p129 = scmp.eq.s32.totalorder %s12, 0
    %p130 = por %p128, %p129
    %p131 = scmp.ne.s32.totalorder %s123, %s125
    %p132 = scmp.eq.s32.totalorder %s17, 1
    %p133 = por %p131, %p132
    %p134 = scmp.ne.s32.totalorder %s125, %s126
    %p135 = scmp.eq.s32.totalorder %s17, 0
    %p136 = por %p134, %p135
    %p137 = scmp.ne.s32.totalorder %s125, %s126
    %p138 = scmp.eq.s32.totalorder %s18, 1
    %p139 = por %p137, %p138
    %p141 = scmp.ne.s32.totalorder %s126, %s140
    %p142 = scmp.eq.s32.totalorder %s18, 0
    %p143 = por %p141, %p142
    %s145 = sadd.s32 %s144, 1
    %p148 = scmp.eq.s32.totalorder %s12, 1
    %p149 = scmp.ne.s32.totalorder %s144, %s146
    %p150 = scmp.eq.s32.totalorder %s12, 0
    %p151 = por %p149, %p150
    %p152 = scmp.ne.s32.totalorder %s144, %s146
    %p153 = scmp.eq.s32.totalorder %s17, 1
    %p154 = por %p152, %p153
    %p155 = scmp.ne.s32.totalorder %s146, %s147
    %p156 = scmp.eq.s32.totalorder %s17, 0
    %p157 = por %p155, %p156
    %p158 = scmp.ne.s32.totalorder %s146, %s147
    %p159 = scmp.eq.s32.totalorder %s18, 1
    %p160 = por %p158, %p159
    %p162 = scmp.ne.s32.totalorder %s147, %s161
    %p163 = scmp.eq.s32.totalorder %s18, 0
    %p164 = por %p162, %p163
    %s165 = ssub.s32 %s19, %s31
    %p166 = scmp.eq.s32.totalorder %s165, 0
    %s168 = sadd.s32 %s167, 1
    %s169 = scalar_select %p166, %s167, %s168
    %p172 = pneg %p166
    %p173 = scmp.eq.s32.totalorder %s12, 1
    %p174 = por %p172, %p173
    %p175 = scmp.ne.s32.totalorder %s167, %s170
    %p176 = scmp.eq.s32.totalorder %s12, 0
    %p177 = por %p175, %p176
    %p178 = scmp.ne.s32.totalorder %s167, %s170
    %p179 = scmp.eq.s32.totalorder %s17, 1
    %p180 = por %p178, %p179
    %p181 = scmp.ne.s32.totalorder %s170, %s171
    %p182 = scmp.eq.s32.totalorder %s17, 0
    %p183 = por %p181, %p182
    %p184 = scmp.ne.s32.totalorder %s170, %s171
    %p185 = scmp.eq.s32.totalorder %s18, 1
    %p186 = por %p184, %p185
    %p188 = scmp.ne.s32.totalorder %s171, %s187
    %p189 = scmp.eq.s32.totalorder %s18, 0
    %p190 = por %p188, %p189
    %p191 = scmp.le.s32.totalorder 1, %s12
    %p192 = scmp.lt.s32.totalorder %s12, 3
    %p193 = pnand %p191, %p192
    %p194 = pneg %p193
    // Predicated region
    $region9: #{simple_card_classifier_forward.1} parent=5 // pred_check
      _
    $region10: #{simple_card_classifier_forward.1} parent=5 // pred_check_branch
      %196 = sbr.rel (%p193) target = $region12
    $region11: #{simple_card_classifier_forward.1} parent=5 // pred_region
      %s197 = ssub.s32 %s12, 1
      // Predicated region
      $region13: #{simple_card_classifier_forward.1} parent=11 // pred_check
        %p198 = pneg %p73
      $region14: #{simple_card_classifier_forward.1} parent=11 // pred_check_branch
        %200 = sbr.rel (%p198) target = $region16
      $region15: #{simple_card_classifier_forward.1} parent=11 // pred_region
        _
      $region16: #{simple_card_classifier_forward.1} parent=11 // pred_fallthru
        _
      // Predicated region
      $region17: #{simple_card_classifier_forward.1} parent=11 // pred_check
        %p201 = pneg %p94
      $region18: #{simple_card_classifier_forward.1} parent=11 // pred_check_branch
        %203 = sbr.rel (%p201) target = $region20
      $region19: #{simple_card_classifier_forward.1} parent=11 // pred_region
        _
      $region20: #{simple_card_classifier_forward.1} parent=11 // pred_fallthru
        _
      // Predicated region
      $region21: #{simple_card_classifier_forward.1} parent=11 // pred_check
        %p204 = pneg %p115
      $region22: #{simple_card_classifier_forward.1} parent=11 // pred_check_branch
        %206 = sbr.rel (%p204) target = $region24
      $region23: #{simple_card_classifier_forward.1} parent=11 // pred_region
        _
      $region24: #{simple_card_classifier_forward.1} parent=11 // pred_fallthru
        _
      // Predicated region
      $region25: #{simple_card_classifier_forward.1} parent=11 // pred_check
        %p207 = pneg %p136
      $region26: #{simple_card_classifier_forward.1} parent=11 // pred_check_branch
        %209 = sbr.rel (%p207) target = $region28
      $region27: #{simple_card_classifier_forward.1} parent=11 // pred_region
        _
      $region28: #{simple_card_classifier_forward.1} parent=11 // pred_fallthru
        _
      // Predicated region
      $region29: #{simple_card_classifier_forward.1} parent=11 // pred_check
        %p210 = pneg %p157
      $region30: #{simple_card_classifier_forward.1} parent=11 // pred_check_branch
        %212 = sbr.rel (%p210) target = $region32
      $region31: #{simple_card_classifier_forward.1} parent=11 // pred_region
        _
      $region32: #{simple_card_classifier_forward.1} parent=11 // pred_fallthru
        _
    $region12: #{simple_card_classifier_forward.1} parent=5 // pred_fallthru
      _
    %p213 = scmp.lt.s32.totalorder %s12, 2
    // Predicated region
    $region33: #{simple_card_classifier_forward.1} parent=5 // pred_check
      %p214 = pneg %p213
    $region34: #{simple_card_classifier_forward.1} parent=5 // pred_check_branch
      %216 = sbr.rel (%p214) target = $region36
    $region35: #{simple_card_classifier_forward.1} parent=5 // pred_region
      // Predicated region
      $region37: #{simple_card_classifier_forward.1} parent=35 // pred_check
        %p217 = pneg %p46
      $region38: #{simple_card_classifier_forward.1} parent=35 // pred_check_branch
        %219 = sbr.rel (%p217) target = $region40
      $region39: #{simple_card_classifier_forward.1} parent=35 // pred_region
        %s220 = smul.u32 8, %s20
        %p221 = scmp.lt.s32.totalorder %s19, 1
        %s222 = scalar_select %p221, %s19, 1
        %p223 = scmp.lt.s32.totalorder %s220, 7
        %s224 = scalar_select %p223, %s220, 7
        %s225 = smul.addr %s222, 8
        %s226 = sadd.s32 %s224, %s225
        %s227 = smul.addr %s226, 4
        %s228 = scalar_lea.vmem %s0, %s227
        %s229 = smul.u32 8, %s20
      $region40: #{simple_card_classifier_forward.1} parent=35 // pred_fallthru
        _
    $region36: #{simple_card_classifier_forward.1} parent=5 // pred_fallthru
      _
    %p230 = scmp.le.s32.totalorder 1, %s12
    %p231 = scmp.lt.s32.totalorder %s12, 3
    %p232 = pnand %p230, %p231
    %p233 = pneg %p232
    // Predicated region
    $region41: #{simple_card_classifier_forward.1} parent=5 // pred_check
      _
    $region42: #{simple_card_classifier_forward.1} parent=5 // pred_check_branch
      %235 = sbr.rel (%p232) target = $region44
    $region43: #{simple_card_classifier_forward.1} parent=5 // pred_region
      %s236 = ssub.s32 %s12, 1
      %s237 = smul.u32 8, %s22
      %p238 = scmp.lt.s32.totalorder %s21, 1
      %s239 = scalar_select %p238, %s21, 1
      %p240 = scmp.lt.s32.totalorder %s237, 7
      %s241 = scalar_select %p240, %s237, 7
      %s242 = smul.addr %s239, 8
      %s243 = sadd.s32 %s241, %s242
      %s244 = smul.addr %s243, 4
      %s245 = scalar_lea.vmem %s0, %s244
      %p246 = pneg %p52
      %p247 = pneg %p49
      %p248 = pneg %p73
      %p249 = pneg %p70
      %p250 = pneg %p94
      %p251 = pneg %p91
      %p252 = pneg %p115
      %p253 = pneg %p112
      %p254 = pneg %p136
      %p255 = pneg %p133
      %p256 = pneg %p157
      %p257 = pneg %p154
      %p258 = pneg %p183
      %p259 = pneg %p180
      %p260 = scmp.lt.s32.totalorder %s21, 1
      %s261 = scalar_select %p260, %s21, 1
      %s262 = smul.addr %s261, 8
      %s263 = scalar_lea.vmem %s6, %s262
      %s264 = smul.u32 8, %s22
      %p265 = scmp.lt.s32.totalorder %s21, 1
      %s266 = scalar_select %p265, %s21, 1
      %p267 = scmp.lt.s32.totalorder %s264, 7
      %s268 = scalar_select %p267, %s264, 7
      %s269 = smul.addr %s266, 8
      %s270 = sadd.s32 %s268, %s269
      %s271 = smul.addr %s270, 4
      %s272 = scalar_lea.vmem %s0, %s271
      %s273 = smul.u32 8, %s22
      %p274 = scmp.lt.s32.totalorder %s21, 1
      %s275 = scalar_select %p274, %s21, 1
      %s276 = smul.addr %s275, 8
      %s277 = scalar_lea.vmem %s6, %s276
      %p280 = scmp.eq.s32.totalorder %s22, 0
      // Predicated region
      $region45: #{simple_card_classifier_forward.1} parent=43 // pred_check
        %p281 = pneg %p280
      $region46: #{simple_card_classifier_forward.1} parent=43 // pred_check_branch
        %283 = sbr.rel (%p281) target = $region48
      $region47: #{simple_card_classifier_forward.1} parent=43 // pred_region
        %284 = vst [vmem:[#allocation2] sm:$0xff] 0.0
        %285 = vst [vmem:[#allocation2 + $0x8] sm:$0xff] 0.0
        %286 = vst [vmem:[#allocation2 + $0x10] sm:$0xff] 0.0
        %287 = vst [vmem:[#allocation2 + $0x18] sm:$0xff] 0.0
        %288 = vst [vmem:[#allocation2 + $0x20] sm:$0xff] 0.0
        %289 = vst [vmem:[#allocation2 + $0x28] sm:$0xff] 0.0
        %290 = vst [vmem:[#allocation2 + $0x30] sm:$0xff] 0.0
        %291 = vst [vmem:[#allocation2 + $0x38] sm:$0xff] 0.0
        %292 = vst [vmem:[#allocation2 + $0x40] sm:$0xff] 0.0
        %293 = vst [vmem:[#allocation2 + $0x48] sm:$0xff] 0.0
      $region48: #{simple_card_classifier_forward.1} parent=43 // pred_fallthru
        _
      %v294 = vld [vmem:[%s272] sm:$0xf]
      %v295 = vld [vmem:[%s272 + $0x4] sm:$0xf]
      %v296 = vld [vmem:[%s272 + $0x8] sm:$0xf]
      %v297 = vld [vmem:[%s272 + $0xc] sm:$0xf]
      %v298 = vld [vmem:[%s272 + $0x10] sm:$0xf]
      %v299 = vld [vmem:[%s272 + $0x14] sm:$0xf]
      %v300 = vld [vmem:[%s272 + $0x18] sm:$0xf]
      %v301 = vld [vmem:[%s272 + $0x1c] sm:$0xf]
      %v302 = vld [vmem:[%s1] sm:$0xf]
      %v303 = vld [vmem:[%s1 + $0x4] sm:$0xf]
      %v304 = vld [vmem:[%s1 + $0x8] sm:$0xf]
      %v305 = vld [vmem:[%s1 + $0xc] sm:$0xf]
      %v314 = vunpack.c.l.b16 %v294
      %v315 = vunpack.c.l.b16 %v295
      %v316 = vunpack.c.l.b16 %v296
      %v317 = vunpack.c.l.b16 %v297
      %v318 = vunpack.c.l.b16 %v298
      %v319 = vunpack.c.l.b16 %v299
      %v320 = vunpack.c.l.b16 %v300
      %v321 = vunpack.c.l.b16 %v301
      %v322 = vpack.c.b16 %v315, %v314
      %v323 = vpack.c.b16 %v317, %v316
      %v324 = vpack.c.b16 %v319, %v318
      %v325 = vpack.c.b16 %v321, %v320
      %v330 = vunpack.c.l.b16 %v302
      %v331 = vunpack.c.l.b16 %v303
      %v332 = vunpack.c.l.b16 %v304
      %v333 = vunpack.c.l.b16 %v305
      %v334 = vpack.c.b16 %v331, %v330
      %v335 = vpack.c.b16 %v333, %v332
      %vm338 = vcmask 261120
      %v340 = vsel %vm338, %v322, 0
      %v343 = vsel %vm338, %v323, 0
      %v346 = vsel %vm338, %v324, 0
      %v349 = vsel %vm338, %v325, 0
      %351 = vmatprep.subr.bf16.mxu0 0
      %352 = vmatpush1.bf16.msra.mxu0 %v334
      %353 = vmatprep.subr.bf16.mxu0 0
      %354 = vmatpush1.bf16.msra.mxu0 %v335
      %355 = vmatprep.subr.bf16.mxu0 0
      %356 = vmatpush1.bf16.msra.mxu0 0
      %357 = vmatprep.subr.bf16.mxu0 0
      %358 = vmatpush1.bf16.msra.mxu0 0
      %359 = vmatprep.subr.bf16.mxu0 0
      %360 = vmatpush1.bf16.msra.mxu0 0
      %361 = vmatprep.subr.bf16.mxu0 0
      %362 = vmatpush1.bf16.msra.mxu0 0
      %363 = vmatprep.subr.bf16.mxu0 0
      %364 = vmatpush1.bf16.msra.mxu0 0
      %365 = vmatprep.subr.bf16.mxu0 0
      %366 = vmatpush1.bf16.msra.mxu0 0
      %367 = vmatprep.subr.bf16.mxu0 0
      %368 = vmatpush1.bf16.msra.mxu0 0
      %369 = vmatprep.subr.bf16.mxu0 0
      %370 = vmatpush1.bf16.msra.mxu0 0
      %371 = vmatprep.subr.bf16.mxu0 0
      %372 = vmatpush1.bf16.msra.mxu0 0
      %373 = vmatprep.subr.bf16.mxu0 0
      %374 = vmatpush1.bf16.msra.mxu0 0
      %375 = vmatprep.subr.bf16.mxu0 0
      %376 = vmatpush1.bf16.msra.mxu0 0
      %377 = vmatprep.subr.bf16.mxu0 0
      %378 = vmatpush1.bf16.msra.mxu0 0
      %379 = vmatprep.subr.bf16.mxu0 0
      %380 = vmatpush1.bf16.msra.mxu0 0
      %381 = vmatprep.subr.bf16.mxu0 0
      %382 = vmatpush1.bf16.msra.mxu0 0
      %383 = vmatprep.mubr.bf16.mxu0 0
      %384 = vmatmul.mubr.bf16.gmra.mrb[0].mxu0 %v340
      %v385 = vpop.f32.mrb[0].mxu0
      %v386 = vadd.f32 0.0, %v385
      %v387 = vpop.f32.mrb[0].mxu0
      %v388 = vpop.f32.mrb[0].mxu0
      %v389 = vadd.f32 0.0, %v388
      %v390 = vpop.f32.mrb[0].mxu0
      %391 = vmatprep.mubr.bf16.mxu0 0
      %392 = vmatmul.mubr.bf16.gmra.mrb[0].mxu0 %v343
      %v393 = vpop.f32.mrb[0].mxu0
      %v394 = vadd.f32 0.0, %v393
      %v395 = vpop.f32.mrb[0].mxu0
      %v396 = vpop.f32.mrb[0].mxu0
      %v397 = vadd.f32 0.0, %v396
      %v398 = vpop.f32.mrb[0].mxu0
      %399 = vmatprep.mubr.bf16.mxu0 0
      %400 = vmatmul.mubr.bf16.gmra.mrb[0].mxu0 %v346
      %v401 = vpop.f32.mrb[0].mxu0
      %v402 = vadd.f32 0.0, %v401
      %v403 = vpop.f32.mrb[0].mxu0
      %v404 = vpop.f32.mrb[0].mxu0
      %v405 = vadd.f32 0.0, %v404
      %v406 = vpop.f32.mrb[0].mxu0
      %407 = vmatprep.mubr.bf16.mxu0 0
      %408 = vmatmul.mubr.bf16.gmra.mrb[0].mxu0 %v349
      %v409 = vpop.f32.mrb[0].mxu0
      %v410 = vadd.f32 0.0, %v409
      %v411 = vpop.f32.mrb[0].mxu0
      %v412 = vpop.f32.mrb[0].mxu0
      %v413 = vadd.f32 0.0, %v412
      %v414 = vpop.f32.mrb[0].mxu0
      %415 = vdwg.mxu0
      %v416 = vmul.f32 %v386, 0.5
      %v417 = vmul.f32 %v389, 0.5
      %v418 = vmul.f32 %v394, 0.5
      %v419 = vmul.f32 %v397, 0.5
      %v420 = vmul.f32 %v402, 0.5
      %v421 = vmul.f32 %v405, 0.5
      %v422 = vmul.f32 %v410, 0.5
      %v423 = vmul.f32 %v413, 0.5
      %v424 = vtanh.pop %v416
      %v425 = vtanh.pop %v417
      %v426 = vtanh.pop %v418
      %v427 = vtanh.pop %v419
      %v428 = vtanh.pop %v420
      %v429 = vtanh.pop %v421
      %v430 = vtanh.pop %v422
      %v431 = vtanh.pop %v423
      %v432 = vmul.f32 %v416, %v424
      %v433 = vmul.f32 %v417, %v425
      %v434 = vmul.f32 %v418, %v426
      %v435 = vmul.f32 %v419, %v427
      %v436 = vmul.f32 %v420, %v428
      %v437 = vmul.f32 %v421, %v429
      %v438 = vmul.f32 %v422, %v430
      %v439 = vmul.f32 %v423, %v431
      %v440 = vadd.f32 %v432, %v416
      %v441 = vadd.f32 %v433, %v417
      %v442 = vadd.f32 %v434, %v418
      %v443 = vadd.f32 %v435, %v419
      %v444 = vadd.f32 %v436, %v420
      %v445 = vadd.f32 %v437, %v421
      %v446 = vadd.f32 %v438, %v422
      %v447 = vadd.f32 %v439, %v423
      %v448 = vpack.c.bf16 %v441, %v440
      %v449 = vpack.c.bf16 %v443, %v442
      %v450 = vpack.c.bf16 %v445, %v444
      %v451 = vpack.c.bf16 %v447, %v446
      %v452 = vld [vmem:[%s2] sm:$0xff]
      %v453 = vld [vmem:[%s2 + $0x8] sm:$0xff]
      %v454 = vld [vmem:[%s2 + $0x10] sm:$0xff]
      %v455 = vld [vmem:[%s2 + $0x18] sm:$0xff]
      %v456 = vld [vmem:[%s2 + $0x20] sm:$0xff]
      %v457 = vld [vmem:[%s2 + $0x28] sm:$0xff]
      %v458 = vld [vmem:[%s2 + $0x30] sm:$0xff]
      %v459 = vld [vmem:[%s2 + $0x38] sm:$0xff]
      %v460 = vld [vmem:[%s2 + $0x40] sm:$0xff]
      %v461 = vld [vmem:[%s2 + $0x48] sm:$0xff]
      %v462 = vld [vmem:[%s2 + $0x50] sm:$0xff]
      %v463 = vld [vmem:[%s2 + $0x58] sm:$0xff]
      %v464 = vld [vmem:[%s2 + $0x60] sm:$0xff]
      %v465 = vld [vmem:[%s2 + $0x68] sm:$0xff]
      %v466 = vld [vmem:[%s2 + $0x70] sm:$0xff]
      %v467 = vld [vmem:[%s2 + $0x78] sm:$0xff]
      %v468 = vld [vmem:[%s2 + $0x80] sm:$0xff]
      %v469 = vld [vmem:[%s2 + $0x88] sm:$0xff]
      %v470 = vld [vmem:[%s2 + $0x90] sm:$0xff]
      %v471 = vld [vmem:[%s2 + $0x98] sm:$0xff]
      %v492 = vunpack.c.l.b16 %v452
      %v493 = vunpack.c.h.b16 %v452
      %v494 = vunpack.c.l.b16 %v453
      %v495 = vunpack.c.h.b16 %v453
      %v496 = vunpack.c.l.b16 %v454
      %v497 = vunpack.c.h.b16 %v454
      %v498 = vunpack.c.l.b16 %v455
      %v499 = vunpack.c.h.b16 %v455
      %v500 = vunpack.c.l.b16 %v456
      %v501 = vunpack.c.h.b16 %v456
      %v502 = vunpack.c.l.b16 %v457
      %v503 = vunpack.c.h.b16 %v457
      %v504 = vunpack.c.l.b16 %v458
      %v505 = vunpack.c.h.b16 %v458
      %v506 = vunpack.c.l.b16 %v459
      %v507 = vunpack.c.h.b16 %v459
      %v508 = vunpack.c.l.b16 %v460
      %v509 = vunpack.c.h.b16 %v460
      %v510 = vunpack.c.l.b16 %v461
      %v511 = vunpack.c.h.b16 %v461
      %v512 = vunpack.c.l.b16 %v462
      %v513 = vunpack.c.h.b16 %v462
      %v514 = vunpack.c.l.b16 %v463
      %v515 = vunpack.c.h.b16 %v463
      %v516 = vunpack.c.l.b16 %v464
      %v517 = vunpack.c.h.b16 %v464
      %v518 = vunpack.c.l.b16 %v465
      %v519 = vunpack.c.h.b16 %v465
      %v520 = vunpack.c.l.b16 %v466
      %v521 = vunpack.c.h.b16 %v466
      %v522 = vunpack.c.l.b16 %v467
      %v523 = vunpack.c.h.b16 %v467
      %v524 = vunpack.c.l.b16 %v468
      %v525 = vunpack.c.h.b16 %v468
      %v526 = vunpack.c.l.b16 %v469
      %v527 = vunpack.c.h.b16 %v469
      %v528 = vunpack.c.l.b16 %v470
      %v529 = vunpack.c.h.b16 %v470
      %v530 = vunpack.c.l.b16 %v471
      %v531 = vunpack.c.h.b16 %v471
      %v532 = vpack.c.b16 %v502, %v492
      %v533 = vpack.c.b16 %v503, %v493
      %v534 = vpack.c.b16 %v504, %v494
      %v535 = vpack.c.b16 %v505, %v495
      %v536 = vpack.c.b16 %v506, %v496
      %v537 = vpack.c.b16 %v507, %v497
      %v538 = vpack.c.b16 %v508, %v498
      %v539 = vpack.c.b16 %v509, %v499
      %v540 = vpack.c.b16 %v510, %v500
      %v541 = vpack.c.b16 %v511, %v501
      %v542 = vpack.c.b16 %v522, %v512
      %v543 = vpack.c.b16 %v523, %v513
      %v544 = vpack.c.b16 %v524, %v514
      %v545 = vpack.c.b16 %v525, %v515
      %v546 = vpack.c.b16 %v526, %v516
      %v547 = vpack.c.b16 %v527, %v517
      %v548 = vpack.c.b16 %v528, %v518
      %v549 = vpack.c.b16 %v529, %v519
      %v550 = vpack.c.b16 %v530, %v520
      %v551 = vpack.c.b16 %v531, %v521
      %v573 = vsel %vm338, %v448, 0
      %v576 = vsel %vm338, %v449, 0
      %v579 = vsel %vm338, %v450, 0
      %v582 = vsel %vm338, %v451, 0
      %584 = vmatprep.subr.bf16.mxu0 %v533
      %585 = vmatpush1.bf16.msra.mxu0 %v532
      %586 = vmatprep.subr.bf16.mxu0 %v543
      %587 = vmatpush1.bf16.msra.mxu0 %v542
      %588 = vmatprep.subr.bf16.mxu0 0
      %589 = vmatpush1.bf16.msra.mxu0 0
      %590 = vmatprep.subr.bf16.mxu0 0
      %591 = vmatpush1.bf16.msra.mxu0 0
      %592 = vmatprep.subr.bf16.mxu0 0
      %593 = vmatpush1.bf16.msra.mxu0 0
      %594 = vmatprep.subr.bf16.mxu0 0
      %595 = vmatpush1.bf16.msra.mxu0 0
      %596 = vmatprep.subr.bf16.mxu0 0
      %597 = vmatpush1.bf16.msra.mxu0 0
      %598 = vmatprep.subr.bf16.mxu0 0
      %599 = vmatpush1.bf16.msra.mxu0 0
      %600 = vmatprep.subr.bf16.mxu0 0
      %601 = vmatpush1.bf16.msra.mxu0 0
      %602 = vmatprep.subr.bf16.mxu0 0
      %603 = vmatpush1.bf16.msra.mxu0 0
      %604 = vmatprep.subr.bf16.mxu0 0
      %605 = vmatpush1.bf16.msra.mxu0 0
      %606 = vmatprep.subr.bf16.mxu0 0
      %607 = vmatpush1.bf16.msra.mxu0 0
      %608 = vmatprep.subr.bf16.mxu0 0
      %609 = vmatpush1.bf16.msra.mxu0 0
      %610 = vmatprep.subr.bf16.mxu0 0
      %611 = vmatpush1.bf16.msra.mxu0 0
      %612 = vmatprep.subr.bf16.mxu0 0
      %613 = vmatpush1.bf16.msra.mxu0 0
      %614 = vmatprep.subr.bf16.mxu0 0
      %615 = vmatpush1.bf16.msra.mxu0 0
      %616 = vmatprep.mubr.bf16.mxu0 0
      %617 = vmatmul.mubr.bf16.gmra.mrb[0].mxu0 %v573
      %v618 = vpop.f32.mrb[0].mxu0
      %v619 = vadd.f32 0.0, %v618
      %v620 = vpop.f32.mrb[0].mxu0
      %v621 = vadd.f32 0.0, %v620
      %v622 = vpop.f32.mrb[0].mxu0
      %v623 = vadd.f32 0.0, %v622
      %v624 = vpop.f32.mrb[0].mxu0
      %v625 = vadd.f32 0.0, %v624
      %626 = vmatprep.mubr.bf16.mxu0 0
      %627 = vmatmul.mubr.bf16.gmra.mrb[0].mxu0 %v576
      %v628 = vpop.f32.mrb[0].mxu0
      %v629 = vadd.f32 0.0, %v628
      %v630 = vpop.f32.mrb[0].mxu0
      %v631 = vadd.f32 0.0, %v630
      %v632 = vpop.f32.mrb[0].mxu0
      %v633 = vadd.f32 0.0, %v632
      %v634 = vpop.f32.mrb[0].mxu0
      %v635 = vadd.f32 0.0, %v634
      %636 = vmatprep.mubr.bf16.mxu0 0
      %637 = vmatmul.mubr.bf16.gmra.mrb[0].mxu0 %v579
      %v638 = vpop.f32.mrb[0].mxu0
      %v639 = vadd.f32 0.0, %v638
      %v640 = vpop.f32.mrb[0].mxu0
      %v641 = vadd.f32 0.0, %v640
      %v642 = vpop.f32.mrb[0].mxu0
      %v643 = vadd.f32 0.0, %v642
      %v644 = vpop.f32.mrb[0].mxu0
      %v645 = vadd.f32 0.0, %v644
      %646 = vmatprep.mubr.bf16.mxu0 0
      %647 = vmatmul.mubr.bf16.gmra.mrb[0].mxu0 %v582
      %v648 = vpop.f32.mrb[0].mxu0
      %v649 = vadd.f32 0.0, %v648
      %v650 = vpop.f32.mrb[0].mxu0
      %v651 = vadd.f32 0.0, %v650
      %v652 = vpop.f32.mrb[0].mxu0
      %v653 = vadd.f32 0.0, %v652
      %v654 = vpop.f32.mrb[0].mxu0
      %v655 = vadd.f32 0.0, %v654
      %656 = vdwg.mxu0
      %657 = vmatprep.subr.bf16.mxu0 %v535
      %658 = vmatpush1.bf16.msra.mxu0 %v534
      %659 = vmatprep.subr.bf16.mxu0 %v545
      %660 = vmatpush1.bf16.msra.mxu0 %v544
      %661 = vmatprep.subr.bf16.mxu0 0
      %662 = vmatpush1.bf16.msra.mxu0 0
      %663 = vmatprep.subr.bf16.mxu0 0
      %664 = vmatpush1.bf16.msra.mxu0 0
      %665 = vmatprep.subr.bf16.mxu0 0
      %666 = vmatpush1.bf16.msra.mxu0 0
      %667 = vmatprep.subr.bf16.mxu0 0
      %668 = vmatpush1.bf16.msra.mxu0 0
      %669 = vmatprep.subr.bf16.mxu0 0
      %670 = vmatpush1.bf16.msra.mxu0 0
      %671 = vmatprep.subr.bf16.mxu0 0
      %672 = vmatpush1.bf16.msra.mxu0 0
      %673 = vmatprep.subr.bf16.mxu0 0
      %674 = vmatpush1.bf16.msra.mxu0 0
      %675 = vmatprep.subr.bf16.mxu0 0
      %676 = vmatpush1.bf16.msra.mxu0 0
      %677 = vmatprep.subr.bf16.mxu0 0
      %678 = vmatpush1.bf16.msra.mxu0 0
      %679 = vmatprep.subr.bf16.mxu0 0
      %680 = vmatpush1.bf16.msra.mxu0 0
      %681 = vmatprep.subr.bf16.mxu0 0
      %682 = vmatpush1.bf16.msra.mxu0 0
      %683 = vmatprep.subr.bf16.mxu0 0
      %684 = vmatpush1.bf16.msra.mxu0 0
      %685 = vmatprep.subr.bf16.mxu0 0
      %686 = vmatpush1.bf16.msra.mxu0 0
      %687 = vmatprep.subr.bf16.mxu0 0
      %688 = vmatpush1.bf16.msra.mxu0 0
      %689 = vmatprep.mubr.bf16.mxu0 0
      %690 = vmatmul.mubr.bf16.gmra.mrb[0].mxu0 %v573
      %v691 = vpop.f32.mrb[0].mxu0
      %v692 = vadd.f32 0.0, %v691
      %v693 = vpop.f32.mrb[0].mxu0
      %v694 = vadd.f32 0.0, %v693
      %v695 = vpop.f32.mrb[0].mxu0
      %v696 = vadd.f32 0.0, %v695
      %v697 = vpop.f32.mrb[0].mxu0
      %v698 = vadd.f32 0.0, %v697
      %699 = vmatprep.mubr.bf16.mxu0 0
      %700 = vmatmul.mubr.bf16.gmra.mrb[0].mxu0 %v576
      %v701 = vpop.f32.mrb[0].mxu0
      %v702 = vadd.f32 0.0, %v701
      %v703 = vpop.f32.mrb[0].mxu0
      %v704 = vadd.f32 0.0, %v703
      %v705 = vpop.f32.mrb[0].mxu0
      %v706 = vadd.f32 0.0, %v705
      %v707 = vpop.f32.mrb[0].mxu0
      %v708 = vadd.f32 0.0, %v707
      %709 = vmatprep.mubr.bf16.mxu0 0
      %710 = vmatmul.mubr.bf16.gmra.mrb[0].mxu0 %v579
      %v711 = vpop.f32.mrb[0].mxu0
      %v712 = vadd.f32 0.0, %v711
      %v713 = vpop.f32.mrb[0].mxu0
      %v714 = vadd.f32 0.0, %v713
      %v715 = vpop.f32.mrb[0].mxu0
      %v716 = vadd.f32 0.0, %v715
      %v717 = vpop.f32.mrb[0].mxu0
      %v718 = vadd.f32 0.0, %v717
      %719 = vmatprep.mubr.bf16.mxu0 0
      %720 = vmatmul.mubr.bf16.gmra.mrb[0].mxu0 %v582
      %v721 = vpop.f32.mrb[0].mxu0
      %v722 = vadd.f32 0.0, %v721
      %v723 = vpop.f32.mrb[0].mxu0
      %v724 = vadd.f32 0.0, %v723
      %v725 = vpop.f32.mrb[0].mxu0
      %v726 = vadd.f32 0.0, %v725
      %v727 = vpop.f32.mrb[0].mxu0
      %v728 = vadd.f32 0.0, %v727
      %729 = vdwg.mxu0
      %730 = vmatprep.subr.bf16.mxu0 %v537
      %731 = vmatpush1.bf16.msra.mxu0 %v536
      %732 = vmatprep.subr.bf16.mxu0 %v547
      %733 = vmatpush1.bf16.msra.mxu0 %v546
      %734 = vmatprep.subr.bf16.mxu0 0
      %735 = vmatpush1.bf16.msra.mxu0 0
      %736 = vmatprep.subr.bf16.mxu0 0
      %737 = vmatpush1.bf16.msra.mxu0 0
      %738 = vmatprep.subr.bf16.mxu0 0
      %739 = vmatpush1.bf16.msra.mxu0 0
      %740 = vmatprep.subr.bf16.mxu0 0
      %741 = vmatpush1.bf16.msra.mxu0 0
      %742 = vmatprep.subr.bf16.mxu0 0
      %743 = vmatpush1.bf16.msra.mxu0 0
      %744 = vmatprep.subr.bf16.mxu0 0
      %745 = vmatpush1.bf16.msra.mxu0 0
      %746 = vmatprep.subr.bf16.mxu0 0
      %747 = vmatpush1.bf16.msra.mxu0 0
      %748 = vmatprep.subr.bf16.mxu0 0
      %749 = vmatpush1.bf16.msra.mxu0 0
      %750 = vmatprep.subr.bf16.mxu0 0
      %751 = vmatpush1.bf16.msra.mxu0 0
      %752 = vmatprep.subr.bf16.mxu0 0
      %753 = vmatpush1.bf16.msra.mxu0 0
      %754 = vmatprep.subr.bf16.mxu0 0
      %755 = vmatpush1.bf16.msra.mxu0 0
      %756 = vmatprep.subr.bf16.mxu0 0
      %757 = vmatpush1.bf16.msra.mxu0 0
      %758 = vmatprep.subr.bf16.mxu0 0
      %759 = vmatpush1.bf16.msra.mxu0 0
      %760 = vmatprep.subr.bf16.mxu0 0
      %761 = vmatpush1.bf16.msra.mxu0 0
      %762 = vmatprep.mubr.bf16.mxu0 0
      %763 = vmatmul.mubr.bf16.gmra.mrb[0].mxu0 %v573
      %v764 = vpop.f32.mrb[0].mxu0
      %v765 = vadd.f32 0.0, %v764
      %v766 = vpop.f32.mrb[0].mxu0
      %v767 = vadd.f32 0.0, %v766
      %v768 = vpop.f32.mrb[0].mxu0
      %v769 = vadd.f32 0.0, %v768
      %v770 = vpop.f32.mrb[0].mxu0
      %v771 = vadd.f32 0.0, %v770
      %772 = vmatprep.mubr.bf16.mxu0 0
      %773 = vmatmul.mubr.bf16.gmra.mrb[0].mxu0 %v576
      %v774 = vpop.f32.mrb[0].mxu0
      %v775 = vadd.f32 0.0, %v774
      %v776 = vpop.f32.mrb[0].mxu0
      %v777 = vadd.f32 0.0, %v776
      %v778 = vpop.f32.mrb[0].mxu0
      %v779 = vadd.f32 0.0, %v778
      %v780 = vpop.f32.mrb[0].mxu0
      %v781 = vadd.f32 0.0, %v780
      %782 = vmatprep.mubr.bf16.mxu0 0
      %783 = vmatmul.mubr.bf16.gmra.mrb[0].mxu0 %v579
      %v784 = vpop.f32.mrb[0].mxu0
      %v785 = vadd.f32 0.0, %v784
      %v786 = vpop.f32.mrb[0].mxu0
      %v787 = vadd.f32 0.0, %v786
      %v788 = vpop.f32.mrb[0].mxu0
      %v789 = vadd.f32 0.0, %v788
      %v790 = vpop.f32.mrb[0].mxu0
      %v791 = vadd.f32 0.0, %v790
      %792 = vmatprep.mubr.bf16.mxu0 0
      %793 = vmatmul.mubr.bf16.gmra.mrb[0].mxu0 %v582
      %v794 = vpop.f32.mrb[0].mxu0
      %v795 = vadd.f32 0.0, %v794
      %v796 = vpop.f32.mrb[0].mxu0
      %v797 = vadd.f32 0.0, %v796
      %v798 = vpop.f32.mrb[0].mxu0
      %v799 = vadd.f32 0.0, %v798
      %v800 = vpop.f32.mrb[0].mxu0
      %v801 = vadd.f32 0.0, %v800
      %802 = vdwg.mxu0
      %803 = vmatprep.subr.bf16.mxu0 %v539
      %804 = vmatpush1.bf16.msra.mxu0 %v538
      %805 = vmatprep.subr.bf16.mxu0 %v549
      %806 = vmatpush1.bf16.msra.mxu0 %v548
      %807 = vmatprep.subr.bf16.mxu0 0
      %808 = vmatpush1.bf16.msra.mxu0 0
      %809 = vmatprep.subr.bf16.mxu0 0
      %810 = vmatpush1.bf16.msra.mxu0 0
      %811 = vmatprep.subr.bf16.mxu0 0
      %812 = vmatpush1.bf16.msra.mxu0 0
      %813 = vmatprep.subr.bf16.mxu0 0
      %814 = vmatpush1.bf16.msra.mxu0 0
      %815 = vmatprep.subr.bf16.mxu0 0
      %816 = vmatpush1.bf16.msra.mxu0 0
      %817 = vmatprep.subr.bf16.mxu0 0
      %818 = vmatpush1.bf16.msra.mxu0 0
      %819 = vmatprep.subr.bf16.mxu0 0
      %820 = vmatpush1.bf16.msra.mxu0 0
      %821 = vmatprep.subr.bf16.mxu0 0
      %822 = vmatpush1.bf16.msra.mxu0 0
      %823 = vmatprep.subr.bf16.mxu0 0
      %824 = vmatpush1.bf16.msra.mxu0 0
      %825 = vmatprep.subr.bf16.mxu0 0
      %826 = vmatpush1.bf16.msra.mxu0 0
      %827 = vmatprep.subr.bf16.mxu0 0
      %828 = vmatpush1.bf16.msra.mxu0 0
      %829 = vmatprep.subr.bf16.mxu0 0
      %830 = vmatpush1.bf16.msra.mxu0 0
      %831 = vmatprep.subr.bf16.mxu0 0
      %832 = vmatpush1.bf16.msra.mxu0 0
      %833 = vmatprep.subr.bf16.mxu0 0
      %834 = vmatpush1.bf16.msra.mxu0 0
      %835 = vmatprep.mubr.bf16.mxu0 0
      %836 = vmatmul.mubr.bf16.gmra.mrb[0].mxu0 %v573
      %v837 = vpop.f32.mrb[0].mxu0
      %v838 = vadd.f32 0.0, %v837
      %v839 = vpop.f32.mrb[0].mxu0
      %v840 = vadd.f32 0.0, %v839
      %v841 = vpop.f32.mrb[0].mxu0
      %v842 = vadd.f32 0.0, %v841
      %v843 = vpop.f32.mrb[0].mxu0
      %v844 = vadd.f32 0.0, %v843
      %845 = vmatprep.mubr.bf16.mxu0 0
      %846 = vmatmul.mubr.bf16.gmra.mrb[0].mxu0 %v576
      %v847 = vpop.f32.mrb[0].mxu0
      %v848 = vadd.f32 0.0, %v847
      %v849 = vpop.f32.mrb[0].mxu0
      %v850 = vadd.f32 0.0, %v849
      %v851 = vpop.f32.mrb[0].mxu0
      %v852 = vadd.f32 0.0, %v851
      %v853 = vpop.f32.mrb[0].mxu0
      %v854 = vadd.f32 0.0, %v853
      %855 = vmatprep.mubr.bf16.mxu0 0
      %856 = vmatmul.mubr.bf16.gmra.mrb[0].mxu0 %v579
      %v857 = vpop.f32.mrb[0].mxu0
      %v858 = vadd.f32 0.0, %v857
      %v859 = vpop.f32.mrb[0].mxu0
      %v860 = vadd.f32 0.0, %v859
      %v861 = vpop.f32.mrb[0].mxu0
      %v862 = vadd.f32 0.0, %v861
      %v863 = vpop.f32.mrb[0].mxu0
      %v864 = vadd.f32 0.0, %v863
      %865 = vmatprep.mubr.bf16.mxu0 0
      %866 = vmatmul.mubr.bf16.gmra.mrb[0].mxu0 %v582
      %v867 = vpop.f32.mrb[0].mxu0
      %v868 = vadd.f32 0.0, %v867
      %v869 = vpop.f32.mrb[0].mxu0
      %v870 = vadd.f32 0.0, %v869
      %v871 = vpop.f32.mrb[0].mxu0
      %v872 = vadd.f32 0.0, %v871
      %v873 = vpop.f32.mrb[0].mxu0
      %v874 = vadd.f32 0.0, %v873
      %875 = vdwg.mxu0
      %876 = vmatprep.subr.bf16.mxu0 %v541
      %877 = vmatpush1.bf16.msra.mxu0 %v540
      %878 = vmatprep.subr.bf16.mxu0 %v551
      %879 = vmatpush1.bf16.msra.mxu0 %v550
      %880 = vmatprep.subr.bf16.mxu0 0
      %881 = vmatpush1.bf16.msra.mxu0 0
      %882 = vmatprep.subr.bf16.mxu0 0
      %883 = vmatpush1.bf16.msra.mxu0 0
      %884 = vmatprep.subr.bf16.mxu0 0
      %885 = vmatpush1.bf16.msra.mxu0 0
      %886 = vmatprep.subr.bf16.mxu0 0
      %887 = vmatpush1.bf16.msra.mxu0 0
      %888 = vmatprep.subr.bf16.mxu0 0
      %889 = vmatpush1.bf16.msra.mxu0 0
      %890 = vmatprep.subr.bf16.mxu0 0
      %891 = vmatpush1.bf16.msra.mxu0 0
      %892 = vmatprep.subr.bf16.mxu0 0
      %893 = vmatpush1.bf16.msra.mxu0 0
      %894 = vmatprep.subr.bf16.mxu0 0
      %895 = vmatpush1.bf16.msra.mxu0 0
      %896 = vmatprep.subr.bf16.mxu0 0
      %897 = vmatpush1.bf16.msra.mxu0 0
      %898 = vmatprep.subr.bf16.mxu0 0
      %899 = vmatpush1.bf16.msra.mxu0 0
      %900 = vmatprep.subr.bf16.mxu0 0
      %901 = vmatpush1.bf16.msra.mxu0 0
      %902 = vmatprep.subr.bf16.mxu0 0
      %903 = vmatpush1.bf16.msra.mxu0 0
      %904 = vmatprep.subr.bf16.mxu0 0
      %905 = vmatpush1.bf16.msra.mxu0 0
      %906 = vmatprep.subr.bf16.mxu0 0
      %907 = vmatpush1.bf16.msra.mxu0 0
      %908 = vmatprep.mubr.bf16.mxu0 0
      %909 = vmatmul.mubr.bf16.gmra.mrb[0].mxu0 %v573
      %v910 = vpop.f32.mrb[0].mxu0
      %v911 = vadd.f32 0.0, %v910
      %v912 = vpop.f32.mrb[0].mxu0
      %v913 = vadd.f32 0.0, %v912
      %v914 = vpop.f32.mrb[0].mxu0
      %v915 = vadd.f32 0.0, %v914
      %v916 = vpop.f32.mrb[0].mxu0
      %v917 = vadd.f32 0.0, %v916
      %918 = vmatprep.mubr.bf16.mxu0 0
      %919 = vmatmul.mubr.bf16.gmra.mrb[0].mxu0 %v576
      %v920 = vpop.f32.mrb[0].mxu0
      %v921 = vadd.f32 0.0, %v920
      %v922 = vpop.f32.mrb[0].mxu0
      %v923 = vadd.f32 0.0, %v922
      %v924 = vpop.f32.mrb[0].mxu0
      %v925 = vadd.f32 0.0, %v924
      %v926 = vpop.f32.mrb[0].mxu0
      %v927 = vadd.f32 0.0, %v926
      %928 = vmatprep.mubr.bf16.mxu0 0
      %929 = vmatmul.mubr.bf16.gmra.mrb[0].mxu0 %v579
      %v930 = vpop.f32.mrb[0].mxu0
      %v931 = vadd.f32 0.0, %v930
      %v932 = vpop.f32.mrb[0].mxu0
      %v933 = vadd.f32 0.0, %v932
      %v934 = vpop.f32.mrb[0].mxu0
      %v935 = vadd.f32 0.0, %v934
      %v936 = vpop.f32.mrb[0].mxu0
      %v937 = vadd.f32 0.0, %v936
      %938 = vmatprep.mubr.bf16.mxu0 0
      %939 = vmatmul.mubr.bf16.gmra.mrb[0].mxu0 %v582
      %v940 = vpop.f32.mrb[0].mxu0
      %v941 = vadd.f32 0.0, %v940
      %v942 = vpop.f32.mrb[0].mxu0
      %v943 = vadd.f32 0.0, %v942
      %v944 = vpop.f32.mrb[0].mxu0
      %v945 = vadd.f32 0.0, %v944
      %v946 = vpop.f32.mrb[0].mxu0
      %v947 = vadd.f32 0.0, %v946
      %948 = vdwg.mxu0
      %v949 = vpack.c.bf16 %v623, %v619
      %v950 = vpack.c.bf16 %v625, %v621
      %v951 = vpack.c.bf16 %v696, %v692
      %v952 = vpack.c.bf16 %v698, %v694
      %v953 = vpack.c.bf16 %v769, %v765
      %v954 = vpack.c.bf16 %v771, %v767
      %v955 = vpack.c.bf16 %v842, %v838
      %v956 = vpack.c.bf16 %v844, %v840
      %v957 = vpack.c.bf16 %v915, %v911
      %v958 = vpack.c.bf16 %v917, %v913
      %v959 = vpack.c.bf16 %v633, %v629
      %v960 = vpack.c.bf16 %v635, %v631
      %v961 = vpack.c.bf16 %v706, %v702
      %v962 = vpack.c.bf16 %v708, %v704
      %v963 = vpack.c.bf16 %v779, %v775
      %v964 = vpack.c.bf16 %v781, %v777
      %v965 = vpack.c.bf16 %v852, %v848
      %v966 = vpack.c.bf16 %v854, %v850
      %v967 = vpack.c.bf16 %v925, %v921
      %v968 = vpack.c.bf16 %v927, %v923
      %v969 = vpack.c.bf16 %v643, %v639
      %v970 = vpack.c.bf16 %v645, %v641
      %v971 = vpack.c.bf16 %v716, %v712
      %v972 = vpack.c.bf16 %v718, %v714
      %v973 = vpack.c.bf16 %v789, %v785
      %v974 = vpack.c.bf16 %v791, %v787
      %v975 = vpack.c.bf16 %v862, %v858
      %v976 = vpack.c.bf16 %v864, %v860
      %v977 = vpack.c.bf16 %v935, %v931
      %v978 = vpack.c.bf16 %v937, %v933
      %v979 = vpack.c.bf16 %v653, %v649
      %v980 = vpack.c.bf16 %v655, %v651
      %v981 = vpack.c.bf16 %v726, %v722
      %v982 = vpack.c.bf16 %v728, %v724
      %v983 = vpack.c.bf16 %v799, %v795
      %v984 = vpack.c.bf16 %v801, %v797
      %v985 = vpack.c.bf16 %v872, %v868
      %v986 = vpack.c.bf16 %v874, %v870
      %v987 = vpack.c.bf16 %v945, %v941
      %v988 = vpack.c.bf16 %v947, %v943
      %v989 = vld [vmem:[%s3] sm:$0xff]
      %v990 = vld [vmem:[%s3 + $0x8] sm:$0x3]
      %v993 = vlaneseq
      %v994 = vshrl.u32 %v993, 7
      %v995 = vsub.s32 0, %v994
      %v996 = vrot.slane %v989, %v995
      %v997 = vlaneseq
      %v998 = vshrl.u32 %v997, 7
      %v999 = vsub.s32 1, %v998
      %v1000 = vrot.slane %v989, %v999
      %v1001 = vlaneseq
      %v1002 = vshrl.u32 %v1001, 7
      %v1003 = vsub.s32 2, %v1002
      %v1004 = vrot.slane %v989, %v1003
      %v1005 = vlaneseq
      %v1006 = vshrl.u32 %v1005, 7
      %v1007 = vsub.s32 3, %v1006
      %v1008 = vrot.slane %v989, %v1007
      %v1009 = vlaneseq
      %v1010 = vshrl.u32 %v1009, 7
      %v1011 = vsub.s32 4, %v1010
      %v1012 = vrot.slane %v989, %v1011
      %v1013 = vlaneseq
      %v1014 = vshrl.u32 %v1013, 7
      %v1015 = vsub.s32 5, %v1014
      %v1016 = vrot.slane %v989, %v1015
      %v1017 = vlaneseq
      %v1018 = vshrl.u32 %v1017, 7
      %v1019 = vsub.s32 6, %v1018
      %v1020 = vrot.slane %v989, %v1019
      %v1021 = vlaneseq
      %v1022 = vshrl.u32 %v1021, 7
      %v1023 = vsub.s32 7, %v1022
      %v1024 = vrot.slane %v989, %v1023
      %v1025 = vlaneseq
      %v1026 = vshrl.u32 %v1025, 7
      %v1027 = vsub.s32 0, %v1026
      %v1028 = vrot.slane %v990, %v1027
      %v1029 = vlaneseq
      %v1030 = vshrl.u32 %v1029, 7
      %v1031 = vsub.s32 1, %v1030
      %v1032 = vrot.slane %v990, %v1031
      %v1043 = vpack.c.bf16 %v996, %v996
      %v1044 = vpack.c.bf16 %v1000, %v1000
      %v1045 = vpack.c.bf16 %v1004, %v1004
      %v1046 = vpack.c.bf16 %v1008, %v1008
      %v1047 = vpack.c.bf16 %v1012, %v1012
      %v1048 = vpack.c.bf16 %v1016, %v1016
      %v1049 = vpack.c.bf16 %v1020, %v1020
      %v1050 = vpack.c.bf16 %v1024, %v1024
      %v1051 = vpack.c.bf16 %v1028, %v1028
      %v1052 = vpack.c.bf16 %v1032, %v1032
      %v1054 = vpack.i.b16 %v1043, %v1043
      %v1056 = vlaneseq
      %v1057 = vshrl.u32 %v1056, 7
      %v1058 = vsub.s32 0, %v1057
      %v1059 = vrot.slane %v1054, %v1058
      %v1061 = vpack.i.b16 %v1044, %v1044
      %v1063 = vlaneseq
      %v1064 = vshrl.u32 %v1063, 7
      %v1065 = vsub.s32 0, %v1064
      %v1066 = vrot.slane %v1061, %v1065
      %v1068 = vpack.i.b16 %v1045, %v1045
      %v1070 = vlaneseq
      %v1071 = vshrl.u32 %v1070, 7
      %v1072 = vsub.s32 0, %v1071
      %v1073 = vrot.slane %v1068, %v1072
      %v1075 = vpack.i.b16 %v1046, %v1046
      %v1077 = vlaneseq
      %v1078 = vshrl.u32 %v1077, 7
      %v1079 = vsub.s32 0, %v1078
      %v1080 = vrot.slane %v1075, %v1079
      %v1082 = vpack.i.b16 %v1047, %v1047
      %v1084 = vlaneseq
      %v1085 = vshrl.u32 %v1084, 7
      %v1086 = vsub.s32 0, %v1085
      %v1087 = vrot.slane %v1082, %v1086
      %v1089 = vpack.i.b16 %v1048, %v1048
      %v1091 = vlaneseq
      %v1092 = vshrl.u32 %v1091, 7
      %v1093 = vsub.s32 0, %v1092
      %v1094 = vrot.slane %v1089, %v1093
      %v1096 = vpack.i.b16 %v1049, %v1049
      %v1098 = vlaneseq
      %v1099 = vshrl.u32 %v1098, 7
      %v1100 = vsub.s32 0, %v1099
      %v1101 = vrot.slane %v1096, %v1100
      %v1103 = vpack.i.b16 %v1050, %v1050
      %v1105 = vlaneseq
      %v1106 = vshrl.u32 %v1105, 7
      %v1107 = vsub.s32 0, %v1106
      %v1108 = vrot.slane %v1103, %v1107
      %v1110 = vpack.i.b16 %v1051, %v1051
      %v1112 = vlaneseq
      %v1113 = vshrl.u32 %v1112, 7
      %v1114 = vsub.s32 0, %v1113
      %v1115 = vrot.slane %v1110, %v1114
      %v1117 = vpack.i.b16 %v1052, %v1052
      %v1119 = vlaneseq
      %v1120 = vshrl.u32 %v1119, 7
      %v1121 = vsub.s32 0, %v1120
      %v1122 = vrot.slane %v1117, %v1121
      %v1123 = vadd.bf16 %v949, %v1059
      %v1124 = vadd.bf16 %v950, %v1066
      %v1125 = vadd.bf16 %v951, %v1073
      %v1126 = vadd.bf16 %v952, %v1080
      %v1127 = vadd.bf16 %v953, %v1087
      %v1128 = vadd.bf16 %v954, %v1094
      %v1129 = vadd.bf16 %v955, %v1101
      %v1130 = vadd.bf16 %v956, %v1108
      %v1131 = vadd.bf16 %v957, %v1115
      %v1132 = vadd.bf16 %v958, %v1122
      %v1133 = vadd.bf16 %v959, %v1059
      %v1134 = vadd.bf16 %v960, %v1066
      %v1135 = vadd.bf16 %v961, %v1073
      %v1136 = vadd.bf16 %v962, %v1080
      %v1137 = vadd.bf16 %v963, %v1087
      %v1138 = vadd.bf16 %v964, %v1094
      %v1139 = vadd.bf16 %v965, %v1101
      %v1140 = vadd.bf16 %v966, %v1108
      %v1141 = vadd.bf16 %v967, %v1115
      %v1142 = vadd.bf16 %v968, %v1122
      %v1143 = vadd.bf16 %v969, %v1059
      %v1144 = vadd.bf16 %v970, %v1066
      %v1145 = vadd.bf16 %v971, %v1073
      %v1146 = vadd.bf16 %v972, %v1080
      %v1147 = vadd.bf16 %v973, %v1087
      %v1148 = vadd.bf16 %v974, %v1094
      %v1149 = vadd.bf16 %v975, %v1101
      %v1150 = vadd.bf16 %v976, %v1108
      %v1151 = vadd.bf16 %v977, %v1115
      %v1152 = vadd.bf16 %v978, %v1122
      %v1153 = vadd.bf16 %v979, %v1059
      %v1154 = vadd.bf16 %v980, %v1066
      %v1155 = vadd.bf16 %v981, %v1073
      %v1156 = vadd.bf16 %v982, %v1080
      %v1157 = vadd.bf16 %v983, %v1087
      %v1158 = vadd.bf16 %v984, %v1094
      %v1159 = vadd.bf16 %v985, %v1101
      %v1160 = vadd.bf16 %v986, %v1108
      %v1161 = vadd.bf16 %v987, %v1115
      %v1162 = vadd.bf16 %v988, %v1122
      %v1163 = vmul.bf16 %v1123, 1056980736
      %v1164 = vmul.bf16 %v1124, 1056980736
      %v1165 = vmul.bf16 %v1125, 1056980736
      %v1166 = vmul.bf16 %v1126, 1056980736
      %v1167 = vmul.bf16 %v1127, 1056980736
      %v1168 = vmul.bf16 %v1128, 1056980736
      %v1169 = vmul.bf16 %v1129, 1056980736
      %v1170 = vmul.bf16 %v1130, 1056980736
      %v1171 = vmul.bf16 %v1131, 1056980736
      %v1172 = vmul.bf16 %v1132, 1056980736
      %v1173 = vmul.bf16 %v1133, 1056980736
      %v1174 = vmul.bf16 %v1134, 1056980736
      %v1175 = vmul.bf16 %v1135, 1056980736
      %v1176 = vmul.bf16 %v1136, 1056980736
      %v1177 = vmul.bf16 %v1137, 1056980736
      %v1178 = vmul.bf16 %v1138, 1056980736
      %v1179 = vmul.bf16 %v1139, 1056980736
      %v1180 = vmul.bf16 %v1140, 1056980736
      %v1181 = vmul.bf16 %v1141, 1056980736
      %v1182 = vmul.bf16 %v1142, 1056980736
      %v1183 = vmul.bf16 %v1143, 1056980736
      %v1184 = vmul.bf16 %v1144, 1056980736
      %v1185 = vmul.bf16 %v1145, 1056980736
      %v1186 = vmul.bf16 %v1146, 1056980736
      %v1187 = vmul.bf16 %v1147, 1056980736
      %v1188 = vmul.bf16 %v1148, 1056980736
      %v1189 = vmul.bf16 %v1149, 1056980736
      %v1190 = vmul.bf16 %v1150, 1056980736
      %v1191 = vmul.bf16 %v1151, 1056980736
      %v1192 = vmul.bf16 %v1152, 1056980736
      %v1193 = vmul.bf16 %v1153, 1056980736
      %v1194 = vmul.bf16 %v1154, 1056980736
      %v1195 = vmul.bf16 %v1155, 1056980736
      %v1196 = vmul.bf16 %v1156, 1056980736
      %v1197 = vmul.bf16 %v1157, 1056980736
      %v1198 = vmul.bf16 %v1158, 1056980736
      %v1199 = vmul.bf16 %v1159, 1056980736
      %v1200 = vmul.bf16 %v1160, 1056980736
      %v1201 = vmul.bf16 %v1161, 1056980736
      %v1202 = vmul.bf16 %v1162, 1056980736
      %v1203 = vtanh.bf16.pop %v1163
      %v1204 = vtanh.bf16.pop %v1164
      %v1205 = vtanh.bf16.pop %v1165
      %v1206 = vtanh.bf16.pop %v1166
      %v1207 = vtanh.bf16.pop %v1167
      %v1208 = vtanh.bf16.pop %v1168
      %v1209 = vtanh.bf16.pop %v1169
      %v1210 = vtanh.bf16.pop %v1170
      %v1211 = vtanh.bf16.pop %v1171
      %v1212 = vtanh.bf16.pop %v1172
      %v1213 = vtanh.bf16.pop %v1173
      %v1214 = vtanh.bf16.pop %v1174
      %v1215 = vtanh.bf16.pop %v1175
      %v1216 = vtanh.bf16.pop %v1176
      %v1217 = vtanh.bf16.pop %v1177
      %v1218 = vtanh.bf16.pop %v1178
      %v1219 = vtanh.bf16.pop %v1179
      %v1220 = vtanh.bf16.pop %v1180
      %v1221 = vtanh.bf16.pop %v1181
      %v1222 = vtanh.bf16.pop %v1182
      %v1223 = vtanh.bf16.pop %v1183
      %v1224 = vtanh.bf16.pop %v1184
      %v1225 = vtanh.bf16.pop %v1185
      %v1226 = vtanh.bf16.pop %v1186
      %v1227 = vtanh.bf16.pop %v1187
      %v1228 = vtanh.bf16.pop %v1188
      %v1229 = vtanh.bf16.pop %v1189
      %v1230 = vtanh.bf16.pop %v1190
      %v1231 = vtanh.bf16.pop %v1191
      %v1232 = vtanh.bf16.pop %v1192
      %v1233 = vtanh.bf16.pop %v1193
      %v1234 = vtanh.bf16.pop %v1194
      %v1235 = vtanh.bf16.pop %v1195
      %v1236 = vtanh.bf16.pop %v1196
      %v1237 = vtanh.bf16.pop %v1197
      %v1238 = vtanh.bf16.pop %v1198
      %v1239 = vtanh.bf16.pop %v1199
      %v1240 = vtanh.bf16.pop %v1200
      %v1241 = vtanh.bf16.pop %v1201
      %v1242 = vtanh.bf16.pop %v1202
      %v1243 = vmul.bf16 %v1163, %v1203
      %v1244 = vmul.bf16 %v1164, %v1204
      %v1245 = vmul.bf16 %v1165, %v1205
      %v1246 = vmul.bf16 %v1166, %v1206
      %v1247 = vmul.bf16 %v1167, %v1207
      %v1248 = vmul.bf16 %v1168, %v1208
      %v1249 = vmul.bf16 %v1169, %v1209
      %v1250 = vmul.bf16 %v1170, %v1210
      %v1251 = vmul.bf16 %v1171, %v1211
      %v1252 = vmul.bf16 %v1172, %v1212
      %v1253 = vmul.bf16 %v1173, %v1213
      %v1254 = vmul.bf16 %v1174, %v1214
      %v1255 = vmul.bf16 %v1175, %v1215
      %v1256 = vmul.bf16 %v1176, %v1216
      %v1257 = vmul.bf16 %v1177, %v1217
      %v1258 = vmul.bf16 %v1178, %v1218
      %v1259 = vmul.bf16 %v1179, %v1219
      %v1260 = vmul.bf16 %v1180, %v1220
      %v1261 = vmul.bf16 %v1181, %v1221
      %v1262 = vmul.bf16 %v1182, %v1222
      %v1263 = vmul.bf16 %v1183, %v1223
      %v1264 = vmul.bf16 %v1184, %v1224
      %v1265 = vmul.bf16 %v1185, %v1225
      %v1266 = vmul.bf16 %v1186, %v1226
      %v1267 = vmul.bf16 %v1187, %v1227
      %v1268 = vmul.bf16 %v1188, %v1228
      %v1269 = vmul.bf16 %v1189, %v1229
      %v1270 = vmul.bf16 %v1190, %v1230
      %v1271 = vmul.bf16 %v1191, %v1231
      %v1272 = vmul.bf16 %v1192, %v1232
      %v1273 = vmul.bf16 %v1193, %v1233
      %v1274 = vmul.bf16 %v1194, %v1234
      %v1275 = vmul.bf16 %v1195, %v1235
      %v1276 = vmul.bf16 %v1196, %v1236
      %v1277 = vmul.bf16 %v1197, %v1237
      %v1278 = vmul.bf16 %v1198, %v1238
      %v1279 = vmul.bf16 %v1199, %v1239
      %v1280 = vmul.bf16 %v1200, %v1240
      %v1281 = vmul.bf16 %v1201, %v1241
      %v1282 = vmul.bf16 %v1202, %v1242
      %v1283 = vadd.bf16 %v1243, %v1163
      %v1284 = vadd.bf16 %v1244, %v1164
      %v1285 = vadd.bf16 %v1245, %v1165
      %v1286 = vadd.bf16 %v1246, %v1166
      %v1287 = vadd.bf16 %v1247, %v1167
      %v1288 = vadd.bf16 %v1248, %v1168
      %v1289 = vadd.bf16 %v1249, %v1169
      %v1290 = vadd.bf16 %v1250, %v1170
      %v1291 = vadd.bf16 %v1251, %v1171
      %v1292 = vadd.bf16 %v1252, %v1172
      %v1293 = vadd.bf16 %v1253, %v1173
      %v1294 = vadd.bf16 %v1254, %v1174
      %v1295 = vadd.bf16 %v1255, %v1175
      %v1296 = vadd.bf16 %v1256, %v1176
      %v1297 = vadd.bf16 %v1257, %v1177
      %v1298 = vadd.bf16 %v1258, %v1178
      %v1299 = vadd.bf16 %v1259, %v1179
      %v1300 = vadd.bf16 %v1260, %v1180
      %v1301 = vadd.bf16 %v1261, %v1181
      %v1302 = vadd.bf16 %v1262, %v1182
      %v1303 = vadd.bf16 %v1263, %v1183
      %v1304 = vadd.bf16 %v1264, %v1184
      %v1305 = vadd.bf16 %v1265, %v1185
      %v1306 = vadd.bf16 %v1266, %v1186
      %v1307 = vadd.bf16 %v1267, %v1187
      %v1308 = vadd.bf16 %v1268, %v1188
      %v1309 = vadd.bf16 %v1269, %v1189
      %v1310 = vadd.bf16 %v1270, %v1190
      %v1311 = vadd.bf16 %v1271, %v1191
      %v1312 = vadd.bf16 %v1272, %v1192
      %v1313 = vadd.bf16 %v1273, %v1193
      %v1314 = vadd.bf16 %v1274, %v1194
      %v1315 = vadd.bf16 %v1275, %v1195
      %v1316 = vadd.bf16 %v1276, %v1196
      %v1317 = vadd.bf16 %v1277, %v1197
      %v1318 = vadd.bf16 %v1278, %v1198
      %v1319 = vadd.bf16 %v1279, %v1199
      %v1320 = vadd.bf16 %v1280, %v1200
      %v1321 = vadd.bf16 %v1281, %v1201
      %v1322 = vadd.bf16 %v1282, %v1202
      %v1323 = vunpack.c.l.bf16 %v1283
      %v1324 = vunpack.c.l.bf16 %v1284
      %v1325 = vunpack.c.l.bf16 %v1285
      %v1326 = vunpack.c.l.bf16 %v1286
      %v1327 = vunpack.c.l.bf16 %v1287
      %v1328 = vunpack.c.l.bf16 %v1288
      %v1329 = vunpack.c.l.bf16 %v1289
      %v1330 = vunpack.c.l.bf16 %v1290
      %v1331 = vunpack.c.l.bf16 %v1291
      %v1332 = vunpack.c.l.bf16 %v1292
      %v1333 = vunpack.c.h.bf16 %v1283
      %v1334 = vunpack.c.h.bf16 %v1284
      %v1335 = vunpack.c.h.bf16 %v1285
      %v1336 = vunpack.c.h.bf16 %v1286
      %v1337 = vunpack.c.h.bf16 %v1287
      %v1338 = vunpack.c.h.bf16 %v1288
      %v1339 = vunpack.c.h.bf16 %v1289
      %v1340 = vunpack.c.h.bf16 %v1290
      %v1341 = vunpack.c.h.bf16 %v1291
      %v1342 = vunpack.c.h.bf16 %v1292
      %v1343 = vunpack.c.l.bf16 %v1293
      %v1344 = vunpack.c.l.bf16 %v1294
      %v1345 = vunpack.c.l.bf16 %v1295
      %v1346 = vunpack.c.l.bf16 %v1296
      %v1347 = vunpack.c.l.bf16 %v1297
      %v1348 = vunpack.c.l.bf16 %v1298
      %v1349 = vunpack.c.l.bf16 %v1299
      %v1350 = vunpack.c.l.bf16 %v1300
      %v1351 = vunpack.c.l.bf16 %v1301
      %v1352 = vunpack.c.l.bf16 %v1302
      %v1353 = vunpack.c.h.bf16 %v1293
      %v1354 = vunpack.c.h.bf16 %v1294
      %v1355 = vunpack.c.h.bf16 %v1295
      %v1356 = vunpack.c.h.bf16 %v1296
      %v1357 = vunpack.c.h.bf16 %v1297
      %v1358 = vunpack.c.h.bf16 %v1298
      %v1359 = vunpack.c.h.bf16 %v1299
      %v1360 = vunpack.c.h.bf16 %v1300
      %v1361 = vunpack.c.h.bf16 %v1301
      %v1362 = vunpack.c.h.bf16 %v1302
      %v1363 = vunpack.c.l.bf16 %v1303
      %v1364 = vunpack.c.l.bf16 %v1304
      %v1365 = vunpack.c.l.bf16 %v1305
      %v1366 = vunpack.c.l.bf16 %v1306
      %v1367 = vunpack.c.l.bf16 %v1307
      %v1368 = vunpack.c.l.bf16 %v1308
      %v1369 = vunpack.c.l.bf16 %v1309
      %v1370 = vunpack.c.l.bf16 %v1310
      %v1371 = vunpack.c.l.bf16 %v1311
      %v1372 = vunpack.c.l.bf16 %v1312
      %v1373 = vunpack.c.h.bf16 %v1303
      %v1374 = vunpack.c.h.bf16 %v1304
      %v1375 = vunpack.c.h.bf16 %v1305
      %v1376 = vunpack.c.h.bf16 %v1306
      %v1377 = vunpack.c.h.bf16 %v1307
      %v1378 = vunpack.c.h.bf16 %v1308
      %v1379 = vunpack.c.h.bf16 %v1309
      %v1380 = vunpack.c.h.bf16 %v1310
      %v1381 = vunpack.c.h.bf16 %v1311
      %v1382 = vunpack.c.h.bf16 %v1312
      %v1383 = vunpack.c.l.bf16 %v1313
      %v1384 = vunpack.c.l.bf16 %v1314
      %v1385 = vunpack.c.l.bf16 %v1315
      %v1386 = vunpack.c.l.bf16 %v1316
      %v1387 = vunpack.c.l.bf16 %v1317
      %v1388 = vunpack.c.l.bf16 %v1318
      %v1389 = vunpack.c.l.bf16 %v1319
      %v1390 = vunpack.c.l.bf16 %v1320
      %v1391 = vunpack.c.l.bf16 %v1321
      %v1392 = vunpack.c.l.bf16 %v1322
      %v1393 = vunpack.c.h.bf16 %v1313
      %v1394 = vunpack.c.h.bf16 %v1314
      %v1395 = vunpack.c.h.bf16 %v1315
      %v1396 = vunpack.c.h.bf16 %v1316
      %v1397 = vunpack.c.h.bf16 %v1317
      %v1398 = vunpack.c.h.bf16 %v1318
      %v1399 = vunpack.c.h.bf16 %v1319
      %v1400 = vunpack.c.h.bf16 %v1320
      %v1401 = vunpack.c.h.bf16 %v1321
      %v1402 = vunpack.c.h.bf16 %v1322
      %v1403 = vld [vmem:[#allocation2] sm:$0xff]
      %v1404 = vld [vmem:[#allocation2 + $0x8] sm:$0xff]
      %v1405 = vld [vmem:[#allocation2 + $0x10] sm:$0xff]
      %v1406 = vld [vmem:[#allocation2 + $0x18] sm:$0xff]
      %v1407 = vld [vmem:[#allocation2 + $0x20] sm:$0xff]
      %v1408 = vld [vmem:[#allocation2 + $0x28] sm:$0xff]
      %v1409 = vld [vmem:[#allocation2 + $0x30] sm:$0xff]
      %v1410 = vld [vmem:[#allocation2 + $0x38] sm:$0xff]
      %v1411 = vld [vmem:[#allocation2 + $0x40] sm:$0xff]
      %v1412 = vld [vmem:[#allocation2 + $0x48] sm:$0xff]
      %v1413 = vadd.f32 %v1323, %v1333
      %v1414 = vadd.f32 %v1413, %v1343
      %v1415 = vadd.f32 %v1414, %v1353
      %v1416 = vadd.f32 %v1415, %v1363
      %v1417 = vadd.f32 %v1416, %v1373
      %v1418 = vadd.f32 %v1417, %v1383
      %v1419 = vadd.f32 %v1418, %v1393
      %v1420 = vadd.f32 %v1324, %v1334
      %v1421 = vadd.f32 %v1420, %v1344
      %v1422 = vadd.f32 %v1421, %v1354
      %v1423 = vadd.f32 %v1422, %v1364
      %v1424 = vadd.f32 %v1423, %v1374
      %v1425 = vadd.f32 %v1424, %v1384
      %v1426 = vadd.f32 %v1425, %v1394
      %v1427 = vadd.f32 %v1325, %v1335
      %v1428 = vadd.f32 %v1427, %v1345
      %v1429 = vadd.f32 %v1428, %v1355
      %v1430 = vadd.f32 %v1429, %v1365
      %v1431 = vadd.f32 %v1430, %v1375
      %v1432 = vadd.f32 %v1431, %v1385
      %v1433 = vadd.f32 %v1432, %v1395
      %v1434 = vadd.f32 %v1326, %v1336
      %v1435 = vadd.f32 %v1434, %v1346
      %v1436 = vadd.f32 %v1435, %v1356
      %v1437 = vadd.f32 %v1436, %v1366
      %v1438 = vadd.f32 %v1437, %v1376
      %v1439 = vadd.f32 %v1438, %v1386
      %v1440 = vadd.f32 %v1439, %v1396
      %v1441 = vadd.f32 %v1327, %v1337
      %v1442 = vadd.f32 %v1441, %v1347
      %v1443 = vadd.f32 %v1442, %v1357
      %v1444 = vadd.f32 %v1443, %v1367
      %v1445 = vadd.f32 %v1444, %v1377
      %v1446 = vadd.f32 %v1445, %v1387
      %v1447 = vadd.f32 %v1446, %v1397
      %v1448 = vadd.f32 %v1328, %v1338
      %v1449 = vadd.f32 %v1448, %v1348
      %v1450 = vadd.f32 %v1449, %v1358
      %v1451 = vadd.f32 %v1450, %v1368
      %v1452 = vadd.f32 %v1451, %v1378
      %v1453 = vadd.f32 %v1452, %v1388
      %v1454 = vadd.f32 %v1453, %v1398
      %v1455 = vadd.f32 %v1329, %v1339
      %v1456 = vadd.f32 %v1455, %v1349
      %v1457 = vadd.f32 %v1456, %v1359
      %v1458 = vadd.f32 %v1457, %v1369
      %v1459 = vadd.f32 %v1458, %v1379
      %v1460 = vadd.f32 %v1459, %v1389
      %v1461 = vadd.f32 %v1460, %v1399
      %v1462 = vadd.f32 %v1330, %v1340
      %v1463 = vadd.f32 %v1462, %v1350
      %v1464 = vadd.f32 %v1463, %v1360
      %v1465 = vadd.f32 %v1464, %v1370
      %v1466 = vadd.f32 %v1465, %v1380
      %v1467 = vadd.f32 %v1466, %v1390
      %v1468 = vadd.f32 %v1467, %v1400
      %v1469 = vadd.f32 %v1331, %v1341
      %v1470 = vadd.f32 %v1469, %v1351
      %v1471 = vadd.f32 %v1470, %v1361
      %v1472 = vadd.f32 %v1471, %v1371
      %v1473 = vadd.f32 %v1472, %v1381
      %v1474 = vadd.f32 %v1473, %v1391
      %v1475 = vadd.f32 %v1474, %v1401
      %v1476 = vadd.f32 %v1332, %v1342
      %v1477 = vadd.f32 %v1476, %v1352
      %v1478 = vadd.f32 %v1477, %v1362
      %v1479 = vadd.f32 %v1478, %v1372
      %v1480 = vadd.f32 %v1479, %v1382
      %v1481 = vadd.f32 %v1480, %v1392
      %v1482 = vadd.f32 %v1481, %v1402
      %v1483 = vadd.f32 %v1403, %v1419
      %v1484 = vadd.f32 %v1404, %v1426
      %v1485 = vadd.f32 %v1405, %v1433
      %v1486 = vadd.f32 %v1406, %v1440
      %v1487 = vadd.f32 %v1407, %v1447
      %v1488 = vadd.f32 %v1408, %v1454
      %v1489 = vadd.f32 %v1409, %v1461
      %v1490 = vadd.f32 %v1410, %v1468
      %v1491 = vadd.f32 %v1411, %v1475
      %v1492 = vadd.f32 %v1412, %v1482
      %1493 = vst [vmem:[#allocation2] sm:$0xff] %v1483
      %1494 = vst [vmem:[#allocation2 + $0x8] sm:$0xff] %v1484
      %1495 = vst [vmem:[#allocation2 + $0x10] sm:$0xff] %v1485
      %1496 = vst [vmem:[#allocation2 + $0x18] sm:$0xff] %v1486
      %1497 = vst [vmem:[#allocation2 + $0x20] sm:$0xff] %v1487
      %1498 = vst [vmem:[#allocation2 + $0x28] sm:$0xff] %v1488
      %1499 = vst [vmem:[#allocation2 + $0x30] sm:$0xff] %v1489
      %1500 = vst [vmem:[#allocation2 + $0x38] sm:$0xff] %v1490
      %1501 = vst [vmem:[#allocation2 + $0x40] sm:$0xff] %v1491
      %1502 = vst [vmem:[#allocation2 + $0x48] sm:$0xff] %v1492
      // Predicated region
      $region49: #{simple_card_classifier_forward.1} parent=43 // pred_check
        %p1503 = pneg %p280
      $region50: #{simple_card_classifier_forward.1} parent=43 // pred_check_branch
        %1505 = sbr.rel (%p1503) target = $region52
      $region51: #{simple_card_classifier_forward.1} parent=43 // pred_region
        %v1506 = vld [vmem:[#allocation2] sm:$0xff]
        %v1507 = vld [vmem:[#allocation2 + $0x8] sm:$0xff]
        %v1508 = vld [vmem:[#allocation2 + $0x10] sm:$0xff]
        %v1509 = vld [vmem:[#allocation2 + $0x18] sm:$0xff]
        %v1510 = vld [vmem:[#allocation2 + $0x20] sm:$0xff]
        %v1511 = vld [vmem:[#allocation2 + $0x28] sm:$0xff]
        %v1512 = vld [vmem:[#allocation2 + $0x30] sm:$0xff]
        %v1513 = vld [vmem:[#allocation2 + $0x38] sm:$0xff]
        %v1514 = vld [vmem:[#allocation2 + $0x40] sm:$0xff]
        %v1515 = vld [vmem:[#allocation2 + $0x48] sm:$0xff]
        %v1516 = vmul.f32 %v1506, 0.015625
        %v1517 = vmul.f32 %v1507, 0.015625
        %v1518 = vmul.f32 %v1508, 0.015625
        %v1519 = vmul.f32 %v1509, 0.015625
        %v1520 = vmul.f32 %v1510, 0.015625
        %v1521 = vmul.f32 %v1511, 0.015625
        %v1522 = vmul.f32 %v1512, 0.015625
        %v1523 = vmul.f32 %v1513, 0.015625
        %v1524 = vmul.f32 %v1514, 0.015625
        %v1525 = vmul.f32 %v1515, 0.015625
        %v1526 = vpack.c.bf16 %v1516, %v1516
        %v1527 = vpack.c.bf16 %v1517, %v1517
        %v1528 = vpack.c.bf16 %v1518, %v1518
        %v1529 = vpack.c.bf16 %v1519, %v1519
        %v1530 = vpack.c.bf16 %v1520, %v1520
        %v1531 = vpack.c.bf16 %v1521, %v1521
        %v1532 = vpack.c.bf16 %v1522, %v1522
        %v1533 = vpack.c.bf16 %v1523, %v1523
        %v1534 = vpack.c.bf16 %v1524, %v1524
        %v1535 = vpack.c.bf16 %v1525, %v1525
        %v1536 = vld [vmem:[%s4] sm:$0xf]
        %v1537 = vld [vmem:[%s4 + $0x4] sm:$0xf]
        %v1538 = vld [vmem:[%s4 + $0x8] sm:$0xf]
        %v1539 = vld [vmem:[%s4 + $0xc] sm:$0xf]
        %v1540 = vld [vmem:[%s4 + $0x10] sm:$0xf]
        %v1541 = vld [vmem:[%s4 + $0x14] sm:$0xf]
        %v1542 = vld [vmem:[%s4 + $0x18] sm:$0xf]
        %v1543 = vld [vmem:[%s4 + $0x1c] sm:$0xf]
        %v1544 = vld [vmem:[%s4 + $0x20] sm:$0xf]
        %v1545 = vld [vmem:[%s4 + $0x24] sm:$0xf]
        %v1546 = vld [vmem:[%s4 + $0x28] sm:$0xf]
        %v1547 = vld [vmem:[%s4 + $0x2c] sm:$0xf]
        %v1548 = vld [vmem:[%s4 + $0x30] sm:$0xf]
        %v1549 = vld [vmem:[%s4 + $0x34] sm:$0xf]
        %v1550 = vld [vmem:[%s4 + $0x38] sm:$0xf]
        %v1551 = vld [vmem:[%s4 + $0x3c] sm:$0xf]
        %v1552 = vld [vmem:[%s4 + $0x40] sm:$0xf]
        %v1553 = vld [vmem:[%s4 + $0x44] sm:$0xf]
        %v1554 = vld [vmem:[%s4 + $0x48] sm:$0xf]
        %v1555 = vld [vmem:[%s4 + $0x4c] sm:$0xf]
        %v1556 = vld [vmem:[%s4 + $0x50] sm:$0xf]
        %v1557 = vld [vmem:[%s4 + $0x54] sm:$0xf]
        %v1558 = vld [vmem:[%s4 + $0x58] sm:$0xf]
        %v1559 = vld [vmem:[%s4 + $0x5c] sm:$0xf]
        %v1560 = vld [vmem:[%s4 + $0x60] sm:$0xf]
        %v1561 = vld [vmem:[%s4 + $0x64] sm:$0xf]
        %v1562 = vld [vmem:[%s4 + $0x68] sm:$0xf]
        %v1563 = vld [vmem:[%s4 + $0x6c] sm:$0xf]
        %v1564 = vld [vmem:[%s4 + $0x70] sm:$0xf]
        %v1565 = vld [vmem:[%s4 + $0x74] sm:$0xf]
        %v1566 = vld [vmem:[%s4 + $0x78] sm:$0xf]
        %v1567 = vld [vmem:[%s4 + $0x7c] sm:$0xf]
        %v1568 = vld [vmem:[%s4 + $0x80] sm:$0xf]
        %v1569 = vld [vmem:[%s4 + $0x84] sm:$0xf]
        %v1570 = vld [vmem:[%s4 + $0x88] sm:$0xf]
        %v1571 = vld [vmem:[%s4 + $0x8c] sm:$0xf]
        %v1572 = vld [vmem:[%s4 + $0x90] sm:$0xf]
        %v1573 = vld [vmem:[%s4 + $0x94] sm:$0xf]
        %v1574 = vld [vmem:[%s4 + $0x98] sm:$0xf]
        %v1575 = vld [vmem:[%s4 + $0x9c] sm:$0xf]
        %v1576 = vld [vmem:[%s4 + $0xa0] sm:$0xf]
        %v1577 = vld [vmem:[%s4 + $0xa4] sm:$0xf]
        %v1578 = vld [vmem:[%s4 + $0xa8] sm:$0xf]
        %v1579 = vld [vmem:[%s4 + $0xac] sm:$0xf]
        %v1580 = vld [vmem:[%s4 + $0xb0] sm:$0xf]
        %v1581 = vld [vmem:[%s4 + $0xb4] sm:$0xf]
        %v1582 = vld [vmem:[%s4 + $0xb8] sm:$0xf]
        %v1583 = vld [vmem:[%s4 + $0xbc] sm:$0xf]
        %v1584 = vld [vmem:[%s4 + $0xc0] sm:$0xf]
        %v1585 = vld [vmem:[%s4 + $0xc4] sm:$0xf]
        %v1586 = vld [vmem:[%s4 + $0xc8] sm:$0xf]
        %v1587 = vld [vmem:[%s4 + $0xcc] sm:$0xf]
        %v1588 = vld [vmem:[%s4 + $0xd0] sm:$0xf]
        %v1589 = vld [vmem:[%s4 + $0xd4] sm:$0xf]
        %v1590 = vld [vmem:[%s4 + $0xd8] sm:$0xf]
        %v1591 = vld [vmem:[%s4 + $0xdc] sm:$0xf]
        %v1592 = vld [vmem:[%s4 + $0xe0] sm:$0xf]
        %v1593 = vld [vmem:[%s4 + $0xe4] sm:$0xf]
        %v1594 = vld [vmem:[%s4 + $0xe8] sm:$0xf]
        %v1595 = vld [vmem:[%s4 + $0xec] sm:$0xf]
        %v1596 = vld [vmem:[%s4 + $0xf0] sm:$0xf]
        %v1597 = vld [vmem:[%s4 + $0xf4] sm:$0xf]
        %v1598 = vld [vmem:[%s4 + $0xf8] sm:$0xf]
        %v1599 = vld [vmem:[%s4 + $0xfc] sm:$0xf]
        %v1600 = vld [vmem:[%s4 + $0x100] sm:$0xf]
        %v1601 = vld [vmem:[%s4 + $0x104] sm:$0xf]
        %v1602 = vld [vmem:[%s4 + $0x108] sm:$0xf]
        %v1603 = vld [vmem:[%s4 + $0x10c] sm:$0xf]
        %v1604 = vld [vmem:[%s4 + $0x110] sm:$0xf]
        %v1605 = vld [vmem:[%s4 + $0x114] sm:$0xf]
        %v1606 = vld [vmem:[%s4 + $0x118] sm:$0xf]
        %v1607 = vld [vmem:[%s4 + $0x11c] sm:$0xf]
        %v1608 = vld [vmem:[%s4 + $0x120] sm:$0xf]
        %v1609 = vld [vmem:[%s4 + $0x124] sm:$0xf]
        %v1610 = vld [vmem:[%s4 + $0x128] sm:$0xf]
        %v1611 = vld [vmem:[%s4 + $0x12c] sm:$0xf]
        %v1612 = vld [vmem:[%s4 + $0x130] sm:$0xf]
        %v1613 = vld [vmem:[%s4 + $0x134] sm:$0xf]
        %v1614 = vld [vmem:[%s4 + $0x138] sm:$0xf]
        %v1615 = vld [vmem:[%s4 + $0x13c] sm:$0xf]
        %v1616 = vld [vmem:[%s4 + $0x140] sm:$0xf]
        %v1617 = vld [vmem:[%s4 + $0x144] sm:$0xf]
        %v1618 = vld [vmem:[%s4 + $0x148] sm:$0xf]
        %v1619 = vld [vmem:[%s4 + $0x14c] sm:$0xf]
        %v1620 = vld [vmem:[%s4 + $0x150] sm:$0xf]
        %v1621 = vld [vmem:[%s4 + $0x154] sm:$0xf]
        %v1622 = vld [vmem:[%s4 + $0x158] sm:$0xf]
        %v1623 = vld [vmem:[%s4 + $0x15c] sm:$0xf]
        %v1624 = vld [vmem:[%s4 + $0x160] sm:$0xf]
        %v1625 = vld [vmem:[%s4 + $0x164] sm:$0xf]
        %v1626 = vld [vmem:[%s4 + $0x168] sm:$0xf]
        %v1627 = vld [vmem:[%s4 + $0x16c] sm:$0xf]
        %v1628 = vld [vmem:[%s4 + $0x170] sm:$0xf]
        %v1629 = vld [vmem:[%s4 + $0x174] sm:$0xf]
        %v1630 = vld [vmem:[%s4 + $0x178] sm:$0xf]
        %v1631 = vld [vmem:[%s4 + $0x17c] sm:$0xf]
        %v1632 = vld [vmem:[%s4 + $0x180] sm:$0xf]
        %v1633 = vld [vmem:[%s4 + $0x184] sm:$0xf]
        %v1634 = vld [vmem:[%s4 + $0x188] sm:$0xf]
        %v1635 = vld [vmem:[%s4 + $0x18c] sm:$0xf]
        %v1636 = vld [vmem:[%s4 + $0x190] sm:$0xf]
        %v1637 = vld [vmem:[%s4 + $0x194] sm:$0xf]
        %v1638 = vld [vmem:[%s4 + $0x198] sm:$0xf]
        %v1639 = vld [vmem:[%s4 + $0x19c] sm:$0xf]
        %v1640 = vld [vmem:[%s4 + $0x1a0] sm:$0xf]
        %v1641 = vld [vmem:[%s4 + $0x1a4] sm:$0xf]
        %v1642 = vld [vmem:[%s4 + $0x1a8] sm:$0xf]
        %v1643 = vld [vmem:[%s4 + $0x1ac] sm:$0xf]
        %v1644 = vld [vmem:[%s4 + $0x1b0] sm:$0xf]
        %v1645 = vld [vmem:[%s4 + $0x1b4] sm:$0xf]
        %v1646 = vld [vmem:[%s4 + $0x1b8] sm:$0xf]
        %v1647 = vld [vmem:[%s4 + $0x1bc] sm:$0xf]
        %v1648 = vld [vmem:[%s4 + $0x1c0] sm:$0xf]
        %v1649 = vld [vmem:[%s4 + $0x1c4] sm:$0xf]
        %v1650 = vld [vmem:[%s4 + $0x1c8] sm:$0xf]
        %v1651 = vld [vmem:[%s4 + $0x1cc] sm:$0xf]
        %v1652 = vld [vmem:[%s4 + $0x1d0] sm:$0xf]
        %v1653 = vld [vmem:[%s4 + $0x1d4] sm:$0xf]
        %v1654 = vld [vmem:[%s4 + $0x1d8] sm:$0xf]
        %v1655 = vld [vmem:[%s4 + $0x1dc] sm:$0xf]
        %v1656 = vld [vmem:[%s4 + $0x1e0] sm:$0xf]
        %v1657 = vld [vmem:[%s4 + $0x1e4] sm:$0xf]
        %v1658 = vld [vmem:[%s4 + $0x1e8] sm:$0xf]
        %v1659 = vld [vmem:[%s4 + $0x1ec] sm:$0xf]
        %v1660 = vld [vmem:[%s4 + $0x1f0] sm:$0xf]
        %v1661 = vld [vmem:[%s4 + $0x1f4] sm:$0xf]
        %v1662 = vld [vmem:[%s4 + $0x1f8] sm:$0xf]
        %v1663 = vld [vmem:[%s4 + $0x1fc] sm:$0xf]
        %v1664 = vld [vmem:[%s4 + $0x200] sm:$0xf]
        %v1665 = vld [vmem:[%s4 + $0x204] sm:$0xf]
        %v1666 = vld [vmem:[%s4 + $0x208] sm:$0xf]
        %v1667 = vld [vmem:[%s4 + $0x20c] sm:$0xf]
        %v1668 = vld [vmem:[%s4 + $0x210] sm:$0xf]
        %v1669 = vld [vmem:[%s4 + $0x214] sm:$0xf]
        %v1670 = vld [vmem:[%s4 + $0x218] sm:$0xf]
        %v1671 = vld [vmem:[%s4 + $0x21c] sm:$0xf]
        %v1672 = vld [vmem:[%s4 + $0x220] sm:$0xf]
        %v1673 = vld [vmem:[%s4 + $0x224] sm:$0xf]
        %v1674 = vld [vmem:[%s4 + $0x228] sm:$0xf]
        %v1675 = vld [vmem:[%s4 + $0x22c] sm:$0xf]
        %v1676 = vld [vmem:[%s4 + $0x230] sm:$0xf]
        %v1677 = vld [vmem:[%s4 + $0x234] sm:$0xf]
        %v1678 = vld [vmem:[%s4 + $0x238] sm:$0xf]
        %v1679 = vld [vmem:[%s4 + $0x23c] sm:$0xf]
        %v1680 = vld [vmem:[%s4 + $0x240] sm:$0xf]
        %v1681 = vld [vmem:[%s4 + $0x244] sm:$0xf]
        %v1682 = vld [vmem:[%s4 + $0x248] sm:$0xf]
        %v1683 = vld [vmem:[%s4 + $0x24c] sm:$0xf]
        %v1684 = vld [vmem:[%s4 + $0x250] sm:$0xf]
        %v1685 = vld [vmem:[%s4 + $0x254] sm:$0xf]
        %v1686 = vld [vmem:[%s4 + $0x258] sm:$0xf]
        %v1687 = vld [vmem:[%s4 + $0x25c] sm:$0xf]
        %v1688 = vld [vmem:[%s4 + $0x260] sm:$0xf]
        %v1689 = vld [vmem:[%s4 + $0x264] sm:$0xf]
        %v1690 = vld [vmem:[%s4 + $0x268] sm:$0xf]
        %v1691 = vld [vmem:[%s4 + $0x26c] sm:$0xf]
        %v1692 = vld [vmem:[%s4 + $0x270] sm:$0xf]
        %v1693 = vld [vmem:[%s4 + $0x274] sm:$0xf]
        %v1694 = vld [vmem:[%s4 + $0x278] sm:$0xf]
        %v1695 = vld [vmem:[%s4 + $0x27c] sm:$0xf]
        %v1856 = vunpack.c.l.b16 %v1536
        %v1857 = vunpack.c.l.b16 %v1537
        %v1858 = vunpack.c.l.b16 %v1538
        %v1859 = vunpack.c.l.b16 %v1539
        %v1860 = vunpack.c.l.b16 %v1540
        %v1861 = vunpack.c.l.b16 %v1541
        %v1862 = vunpack.c.l.b16 %v1542
        %v1863 = vunpack.c.l.b16 %v1543
        %v1864 = vunpack.c.l.b16 %v1544
        %v1865 = vunpack.c.l.b16 %v1545
        %v1866 = vunpack.c.l.b16 %v1546
        %v1867 = vunpack.c.l.b16 %v1547
        %v1868 = vunpack.c.l.b16 %v1548
        %v1869 = vunpack.c.l.b16 %v1549
        %v1870 = vunpack.c.l.b16 %v1550
        %v1871 = vunpack.c.l.b16 %v1551
        %v1872 = vunpack.c.l.b16 %v1552
        %v1873 = vunpack.c.l.b16 %v1553
        %v1874 = vunpack.c.l.b16 %v1554
        %v1875 = vunpack.c.l.b16 %v1555
        %v1876 = vunpack.c.l.b16 %v1556
        %v1877 = vunpack.c.l.b16 %v1557
        %v1878 = vunpack.c.l.b16 %v1558
        %v1879 = vunpack.c.l.b16 %v1559
        %v1880 = vunpack.c.l.b16 %v1560
        %v1881 = vunpack.c.l.b16 %v1561
        %v1882 = vunpack.c.l.b16 %v1562
        %v1883 = vunpack.c.l.b16 %v1563
        %v1884 = vunpack.c.l.b16 %v1564
        %v1885 = vunpack.c.l.b16 %v1565
        %v1886 = vunpack.c.l.b16 %v1566
        %v1887 = vunpack.c.l.b16 %v1567
        %v1888 = vunpack.c.l.b16 %v1568
        %v1889 = vunpack.c.l.b16 %v1569
        %v1890 = vunpack.c.l.b16 %v1570
        %v1891 = vunpack.c.l.b16 %v1571
        %v1892 = vunpack.c.l.b16 %v1572
        %v1893 = vunpack.c.l.b16 %v1573
        %v1894 = vunpack.c.l.b16 %v1574
        %v1895 = vunpack.c.l.b16 %v1575
        %v1896 = vunpack.c.l.b16 %v1576
        %v1897 = vunpack.c.l.b16 %v1577
        %v1898 = vunpack.c.l.b16 %v1578
        %v1899 = vunpack.c.l.b16 %v1579
        %v1900 = vunpack.c.l.b16 %v1580
        %v1901 = vunpack.c.l.b16 %v1581
        %v1902 = vunpack.c.l.b16 %v1582
        %v1903 = vunpack.c.l.b16 %v1583
        %v1904 = vunpack.c.l.b16 %v1584
        %v1905 = vunpack.c.l.b16 %v1585
        %v1906 = vunpack.c.l.b16 %v1586
        %v1907 = vunpack.c.l.b16 %v1587
        %v1908 = vunpack.c.l.b16 %v1588
        %v1909 = vunpack.c.l.b16 %v1589
        %v1910 = vunpack.c.l.b16 %v1590
        %v1911 = vunpack.c.l.b16 %v1591
        %v1912 = vunpack.c.l.b16 %v1592
        %v1913 = vunpack.c.l.b16 %v1593
        %v1914 = vunpack.c.l.b16 %v1594
        %v1915 = vunpack.c.l.b16 %v1595
        %v1916 = vunpack.c.l.b16 %v1596
        %v1917 = vunpack.c.l.b16 %v1597
        %v1918 = vunpack.c.l.b16 %v1598
        %v1919 = vunpack.c.l.b16 %v1599
        %v1920 = vunpack.c.l.b16 %v1600
        %v1921 = vunpack.c.l.b16 %v1601
        %v1922 = vunpack.c.l.b16 %v1602
        %v1923 = vunpack.c.l.b16 %v1603
        %v1924 = vunpack.c.l.b16 %v1604
        %v1925 = vunpack.c.l.b16 %v1605
        %v1926 = vunpack.c.l.b16 %v1606
        %v1927 = vunpack.c.l.b16 %v1607
        %v1928 = vunpack.c.l.b16 %v1608
        %v1929 = vunpack.c.l.b16 %v1609
        %v1930 = vunpack.c.l.b16 %v1610
        %v1931 = vunpack.c.l.b16 %v1611
        %v1932 = vunpack.c.l.b16 %v1612
        %v1933 = vunpack.c.l.b16 %v1613
        %v1934 = vunpack.c.l.b16 %v1614
        %v1935 = vunpack.c.l.b16 %v1615
        %v1936 = vunpack.c.l.b16 %v1616
        %v1937 = vunpack.c.l.b16 %v1617
        %v1938 = vunpack.c.l.b16 %v1618
        %v1939 = vunpack.c.l.b16 %v1619
        %v1940 = vunpack.c.l.b16 %v1620
        %v1941 = vunpack.c.l.b16 %v1621
        %v1942 = vunpack.c.l.b16 %v1622
        %v1943 = vunpack.c.l.b16 %v1623
        %v1944 = vunpack.c.l.b16 %v1624
        %v1945 = vunpack.c.l.b16 %v1625
        %v1946 = vunpack.c.l.b16 %v1626
        %v1947 = vunpack.c.l.b16 %v1627
        %v1948 = vunpack.c.l.b16 %v1628
        %v1949 = vunpack.c.l.b16 %v1629
        %v1950 = vunpack.c.l.b16 %v1630
        %v1951 = vunpack.c.l.b16 %v1631
        %v1952 = vunpack.c.l.b16 %v1632
        %v1953 = vunpack.c.l.b16 %v1633
        %v1954 = vunpack.c.l.b16 %v1634
        %v1955 = vunpack.c.l.b16 %v1635
        %v1956 = vunpack.c.l.b16 %v1636
        %v1957 = vunpack.c.l.b16 %v1637
        %v1958 = vunpack.c.l.b16 %v1638
        %v1959 = vunpack.c.l.b16 %v1639
        %v1960 = vunpack.c.l.b16 %v1640
        %v1961 = vunpack.c.l.b16 %v1641
        %v1962 = vunpack.c.l.b16 %v1642
        %v1963 = vunpack.c.l.b16 %v1643
        %v1964 = vunpack.c.l.b16 %v1644
        %v1965 = vunpack.c.l.b16 %v1645
        %v1966 = vunpack.c.l.b16 %v1646
        %v1967 = vunpack.c.l.b16 %v1647
        %v1968 = vunpack.c.l.b16 %v1648
        %v1969 = vunpack.c.l.b16 %v1649
        %v1970 = vunpack.c.l.b16 %v1650
        %v1971 = vunpack.c.l.b16 %v1651
        %v1972 = vunpack.c.l.b16 %v1652
        %v1973 = vunpack.c.l.b16 %v1653
        %v1974 = vunpack.c.l.b16 %v1654
        %v1975 = vunpack.c.l.b16 %v1655
        %v1976 = vunpack.c.l.b16 %v1656
        %v1977 = vunpack.c.l.b16 %v1657
        %v1978 = vunpack.c.l.b16 %v1658
        %v1979 = vunpack.c.l.b16 %v1659
        %v1980 = vunpack.c.l.b16 %v1660
        %v1981 = vunpack.c.l.b16 %v1661
        %v1982 = vunpack.c.l.b16 %v1662
        %v1983 = vunpack.c.l.b16 %v1663
        %v1984 = vunpack.c.l.b16 %v1664
        %v1985 = vunpack.c.l.b16 %v1665
        %v1986 = vunpack.c.l.b16 %v1666
        %v1987 = vunpack.c.l.b16 %v1667
        %v1988 = vunpack.c.l.b16 %v1668
        %v1989 = vunpack.c.l.b16 %v1669
        %v1990 = vunpack.c.l.b16 %v1670
        %v1991 = vunpack.c.l.b16 %v1671
        %v1992 = vunpack.c.l.b16 %v1672
        %v1993 = vunpack.c.l.b16 %v1673
        %v1994 = vunpack.c.l.b16 %v1674
        %v1995 = vunpack.c.l.b16 %v1675
        %v1996 = vunpack.c.l.b16 %v1676
        %v1997 = vunpack.c.l.b16 %v1677
        %v1998 = vunpack.c.l.b16 %v1678
        %v1999 = vunpack.c.l.b16 %v1679
        %v2000 = vunpack.c.l.b16 %v1680
        %v2001 = vunpack.c.l.b16 %v1681
        %v2002 = vunpack.c.l.b16 %v1682
        %v2003 = vunpack.c.l.b16 %v1683
        %v2004 = vunpack.c.l.b16 %v1684
        %v2005 = vunpack.c.l.b16 %v1685
        %v2006 = vunpack.c.l.b16 %v1686
        %v2007 = vunpack.c.l.b16 %v1687
        %v2008 = vunpack.c.l.b16 %v1688
        %v2009 = vunpack.c.l.b16 %v1689
        %v2010 = vunpack.c.l.b16 %v1690
        %v2011 = vunpack.c.l.b16 %v1691
        %v2012 = vunpack.c.l.b16 %v1692
        %v2013 = vunpack.c.l.b16 %v1693
        %v2014 = vunpack.c.l.b16 %v1694
        %v2015 = vunpack.c.l.b16 %v1695
        %v2016 = vpack.c.b16 %v1857, %v1856
        %v2017 = vpack.c.b16 %v1859, %v1858
        %v2018 = vpack.c.b16 %v1861, %v1860
        %v2019 = vpack.c.b16 %v1863, %v1862
        %v2020 = vpack.c.b16 %v1865, %v1864
        %v2021 = vpack.c.b16 %v1867, %v1866
        %v2022 = vpack.c.b16 %v1869, %v1868
        %v2023 = vpack.c.b16 %v1871, %v1870
        %v2024 = vpack.c.b16 %v1873, %v1872
        %v2025 = vpack.c.b16 %v1875, %v1874
        %v2026 = vpack.c.b16 %v1877, %v1876
        %v2027 = vpack.c.b16 %v1879, %v1878
        %v2028 = vpack.c.b16 %v1881, %v1880
        %v2029 = vpack.c.b16 %v1883, %v1882
        %v2030 = vpack.c.b16 %v1885, %v1884
        %v2031 = vpack.c.b16 %v1887, %v1886
        %v2032 = vpack.c.b16 %v1889, %v1888
        %v2033 = vpack.c.b16 %v1891, %v1890
        %v2034 = vpack.c.b16 %v1893, %v1892
        %v2035 = vpack.c.b16 %v1895, %v1894
        %v2036 = vpack.c.b16 %v1897, %v1896
        %v2037 = vpack.c.b16 %v1899, %v1898
        %v2038 = vpack.c.b16 %v1901, %v1900
        %v2039 = vpack.c.b16 %v1903, %v1902
        %v2040 = vpack.c.b16 %v1905, %v1904
        %v2041 = vpack.c.b16 %v1907, %v1906
        %v2042 = vpack.c.b16 %v1909, %v1908
        %v2043 = vpack.c.b16 %v1911, %v1910
        %v2044 = vpack.c.b16 %v1913, %v1912
        %v2045 = vpack.c.b16 %v1915, %v1914
        %v2046 = vpack.c.b16 %v1917, %v1916
        %v2047 = vpack.c.b16 %v1919, %v1918
        %v2048 = vpack.c.b16 %v1921, %v1920
        %v2049 = vpack.c.b16 %v1923, %v1922
        %v2050 = vpack.c.b16 %v1925, %v1924
        %v2051 = vpack.c.b16 %v1927, %v1926
        %v2052 = vpack.c.b16 %v1929, %v1928
        %v2053 = vpack.c.b16 %v1931, %v1930
        %v2054 = vpack.c.b16 %v1933, %v1932
        %v2055 = vpack.c.b16 %v1935, %v1934
        %v2056 = vpack.c.b16 %v1937, %v1936
        %v2057 = vpack.c.b16 %v1939, %v1938
        %v2058 = vpack.c.b16 %v1941, %v1940
        %v2059 = vpack.c.b16 %v1943, %v1942
        %v2060 = vpack.c.b16 %v1945, %v1944
        %v2061 = vpack.c.b16 %v1947, %v1946
        %v2062 = vpack.c.b16 %v1949, %v1948
        %v2063 = vpack.c.b16 %v1951, %v1950
        %v2064 = vpack.c.b16 %v1953, %v1952
        %v2065 = vpack.c.b16 %v1955, %v1954
        %v2066 = vpack.c.b16 %v1957, %v1956
        %v2067 = vpack.c.b16 %v1959, %v1958
        %v2068 = vpack.c.b16 %v1961, %v1960
        %v2069 = vpack.c.b16 %v1963, %v1962
        %v2070 = vpack.c.b16 %v1965, %v1964
        %v2071 = vpack.c.b16 %v1967, %v1966
        %v2072 = vpack.c.b16 %v1969, %v1968
        %v2073 = vpack.c.b16 %v1971, %v1970
        %v2074 = vpack.c.b16 %v1973, %v1972
        %v2075 = vpack.c.b16 %v1975, %v1974
        %v2076 = vpack.c.b16 %v1977, %v1976
        %v2077 = vpack.c.b16 %v1979, %v1978
        %v2078 = vpack.c.b16 %v1981, %v1980
        %v2079 = vpack.c.b16 %v1983, %v1982
        %v2080 = vpack.c.b16 %v1985, %v1984
        %v2081 = vpack.c.b16 %v1987, %v1986
        %v2082 = vpack.c.b16 %v1989, %v1988
        %v2083 = vpack.c.b16 %v1991, %v1990
        %v2084 = vpack.c.b16 %v1993, %v1992
        %v2085 = vpack.c.b16 %v1995, %v1994
        %v2086 = vpack.c.b16 %v1997, %v1996
        %v2087 = vpack.c.b16 %v1999, %v1998
        %v2088 = vpack.c.b16 %v2001, %v2000
        %v2089 = vpack.c.b16 %v2003, %v2002
        %v2090 = vpack.c.b16 %v2005, %v2004
        %v2091 = vpack.c.b16 %v2007, %v2006
        %v2092 = vpack.c.b16 %v2009, %v2008
        %v2093 = vpack.c.b16 %v2011, %v2010
        %v2094 = vpack.c.b16 %v2013, %v2012
        %v2095 = vpack.c.b16 %v2015, %v2014
        %2176 = vmatprep.subr.bf16.mxu0 0
        %2177 = vmatpush1.bf16.msra.mxu0 %v2016
        %2178 = vmatprep.subr.bf16.mxu0 0
        %2179 = vmatpush1.bf16.msra.mxu0 %v2017
        %2180 = vmatprep.subr.bf16.mxu0 0
        %2181 = vmatpush1.bf16.msra.mxu0 %v2018
        %2182 = vmatprep.subr.bf16.mxu0 0
        %2183 = vmatpush1.bf16.msra.mxu0 %v2019
        %2184 = vmatprep.subr.bf16.mxu0 0
        %2185 = vmatpush1.bf16.msra.mxu0 %v2020
        %2186 = vmatprep.subr.bf16.mxu0 0
        %2187 = vmatpush1.bf16.msra.mxu0 %v2021
        %2188 = vmatprep.subr.bf16.mxu0 0
        %2189 = vmatpush1.bf16.msra.mxu0 %v2022
        %2190 = vmatprep.subr.bf16.mxu0 0
        %2191 = vmatpush1.bf16.msra.mxu0 %v2023
        %2192 = vmatprep.subr.bf16.mxu0 0
        %2193 = vmatpush1.bf16.msra.mxu0 %v2024
        %2194 = vmatprep.subr.bf16.mxu0 0
        %2195 = vmatpush1.bf16.msra.mxu0 %v2025
        %2196 = vmatprep.subr.bf16.mxu0 0
        %2197 = vmatpush1.bf16.msra.mxu0 %v2026
        %2198 = vmatprep.subr.bf16.mxu0 0
        %2199 = vmatpush1.bf16.msra.mxu0 %v2027
        %2200 = vmatprep.subr.bf16.mxu0 0
        %2201 = vmatpush1.bf16.msra.mxu0 %v2028
        %2202 = vmatprep.subr.bf16.mxu0 0
        %2203 = vmatpush1.bf16.msra.mxu0 %v2029
        %2204 = vmatprep.subr.bf16.mxu0 0
        %2205 = vmatpush1.bf16.msra.mxu0 %v2030
        %2206 = vmatprep.subr.bf16.mxu0 0
        %2207 = vmatpush1.bf16.msra.mxu0 %v2031
        %2208 = vmatprep.mubr.bf16.mxu0 %v1527
        %2209 = vmatmul.mubr.bf16.gmra.mrb[0].mxu0 %v1526
        %v2210 = vpop.f32.mrb[0].mxu0
        %v2211 = vadd.f32 0.0, %v2210
        %v2212 = vpop.f32.mrb[0].mxu0
        %v2213 = vpop.f32.mrb[0].mxu0
        %v2214 = vpop.f32.mrb[0].mxu0
        %2215 = vdwg.mxu0
        %2216 = vmatprep.subr.bf16.mxu0 0
        %2217 = vmatpush1.bf16.msra.mxu0 %v2032
        %2218 = vmatprep.subr.bf16.mxu0 0
        %2219 = vmatpush1.bf16.msra.mxu0 %v2033
        %2220 = vmatprep.subr.bf16.mxu0 0
        %2221 = vmatpush1.bf16.msra.mxu0 %v2034
        %2222 = vmatprep.subr.bf16.mxu0 0
        %2223 = vmatpush1.bf16.msra.mxu0 %v2035
        %2224 = vmatprep.subr.bf16.mxu0 0
        %2225 = vmatpush1.bf16.msra.mxu0 %v2036
        %2226 = vmatprep.subr.bf16.mxu0 0
        %2227 = vmatpush1.bf16.msra.mxu0 %v2037
        %2228 = vmatprep.subr.bf16.mxu0 0
        %2229 = vmatpush1.bf16.msra.mxu0 %v2038
        %2230 = vmatprep.subr.bf16.mxu0 0
        %2231 = vmatpush1.bf16.msra.mxu0 %v2039
        %2232 = vmatprep.subr.bf16.mxu0 0
        %2233 = vmatpush1.bf16.msra.mxu0 %v2040
        %2234 = vmatprep.subr.bf16.mxu0 0
        %2235 = vmatpush1.bf16.msra.mxu0 %v2041
        %2236 = vmatprep.subr.bf16.mxu0 0
        %2237 = vmatpush1.bf16.msra.mxu0 %v2042
        %2238 = vmatprep.subr.bf16.mxu0 0
        %2239 = vmatpush1.bf16.msra.mxu0 %v2043
        %2240 = vmatprep.subr.bf16.mxu0 0
        %2241 = vmatpush1.bf16.msra.mxu0 %v2044
        %2242 = vmatprep.subr.bf16.mxu0 0
        %2243 = vmatpush1.bf16.msra.mxu0 %v2045
        %2244 = vmatprep.subr.bf16.mxu0 0
        %2245 = vmatpush1.bf16.msra.mxu0 %v2046
        %2246 = vmatprep.subr.bf16.mxu0 0
        %2247 = vmatpush1.bf16.msra.mxu0 %v2047
        %2248 = vmatprep.mubr.bf16.mxu0 %v1529
        %2249 = vmatmul.mubr.bf16.gmra.mrb[0].mxu0 %v1528
        %v2250 = vpop.f32.mrb[0].mxu0
        %v2251 = vadd.f32 %v2211, %v2250
        %v2252 = vpop.f32.mrb[0].mxu0
        %v2253 = vpop.f32.mrb[0].mxu0
        %v2254 = vpop.f32.mrb[0].mxu0
        %2255 = vdwg.mxu0
        %2256 = vmatprep.subr.bf16.mxu0 0
        %2257 = vmatpush1.bf16.msra.mxu0 %v2048
        %2258 = vmatprep.subr.bf16.mxu0 0
        %2259 = vmatpush1.bf16.msra.mxu0 %v2049
        %2260 = vmatprep.subr.bf16.mxu0 0
        %2261 = vmatpush1.bf16.msra.mxu0 %v2050
        %2262 = vmatprep.subr.bf16.mxu0 0
        %2263 = vmatpush1.bf16.msra.mxu0 %v2051
        %2264 = vmatprep.subr.bf16.mxu0 0
        %2265 = vmatpush1.bf16.msra.mxu0 %v2052
        %2266 = vmatprep.subr.bf16.mxu0 0
        %2267 = vmatpush1.bf16.msra.mxu0 %v2053
        %2268 = vmatprep.subr.bf16.mxu0 0
        %2269 = vmatpush1.bf16.msra.mxu0 %v2054
        %2270 = vmatprep.subr.bf16.mxu0 0
        %2271 = vmatpush1.bf16.msra.mxu0 %v2055
        %2272 = vmatprep.subr.bf16.mxu0 0
        %2273 = vmatpush1.bf16.msra.mxu0 %v2056
        %2274 = vmatprep.subr.bf16.mxu0 0
        %2275 = vmatpush1.bf16.msra.mxu0 %v2057
        %2276 = vmatprep.subr.bf16.mxu0 0
        %2277 = vmatpush1.bf16.msra.mxu0 %v2058
        %2278 = vmatprep.subr.bf16.mxu0 0
        %2279 = vmatpush1.bf16.msra.mxu0 %v2059
        %2280 = vmatprep.subr.bf16.mxu0 0
        %2281 = vmatpush1.bf16.msra.mxu0 %v2060
        %2282 = vmatprep.subr.bf16.mxu0 0
        %2283 = vmatpush1.bf16.msra.mxu0 %v2061
        %2284 = vmatprep.subr.bf16.mxu0 0
        %2285 = vmatpush1.bf16.msra.mxu0 %v2062
        %2286 = vmatprep.subr.bf16.mxu0 0
        %2287 = vmatpush1.bf16.msra.mxu0 %v2063
        %2288 = vmatprep.mubr.bf16.mxu0 %v1531
        %2289 = vmatmul.mubr.bf16.gmra.mrb[0].mxu0 %v1530
        %v2290 = vpop.f32.mrb[0].mxu0
        %v2291 = vadd.f32 %v2251, %v2290
        %v2292 = vpop.f32.mrb[0].mxu0
        %v2293 = vpop.f32.mrb[0].mxu0
        %v2294 = vpop.f32.mrb[0].mxu0
        %2295 = vdwg.mxu0
        %2296 = vmatprep.subr.bf16.mxu0 0
        %2297 = vmatpush1.bf16.msra.mxu0 %v2064
        %2298 = vmatprep.subr.bf16.mxu0 0
        %2299 = vmatpush1.bf16.msra.mxu0 %v2065
        %2300 = vmatprep.subr.bf16.mxu0 0
        %2301 = vmatpush1.bf16.msra.mxu0 %v2066
        %2302 = vmatprep.subr.bf16.mxu0 0
        %2303 = vmatpush1.bf16.msra.mxu0 %v2067
        %2304 = vmatprep.subr.bf16.mxu0 0
        %2305 = vmatpush1.bf16.msra.mxu0 %v2068
        %2306 = vmatprep.subr.bf16.mxu0 0
        %2307 = vmatpush1.bf16.msra.mxu0 %v2069
        %2308 = vmatprep.subr.bf16.mxu0 0
        %2309 = vmatpush1.bf16.msra.mxu0 %v2070
        %2310 = vmatprep.subr.bf16.mxu0 0
        %2311 = vmatpush1.bf16.msra.mxu0 %v2071
        %2312 = vmatprep.subr.bf16.mxu0 0
        %2313 = vmatpush1.bf16.msra.mxu0 %v2072
        %2314 = vmatprep.subr.bf16.mxu0 0
        %2315 = vmatpush1.bf16.msra.mxu0 %v2073
        %2316 = vmatprep.subr.bf16.mxu0 0
        %2317 = vmatpush1.bf16.msra.mxu0 %v2074
        %2318 = vmatprep.subr.bf16.mxu0 0
        %2319 = vmatpush1.bf16.msra.mxu0 %v2075
        %2320 = vmatprep.subr.bf16.mxu0 0
        %2321 = vmatpush1.bf16.msra.mxu0 %v2076
        %2322 = vmatprep.subr.bf16.mxu0 0
        %2323 = vmatpush1.bf16.msra.mxu0 %v2077
        %2324 = vmatprep.subr.bf16.mxu0 0
        %2325 = vmatpush1.bf16.msra.mxu0 %v2078
        %2326 = vmatprep.subr.bf16.mxu0 0
        %2327 = vmatpush1.bf16.msra.mxu0 %v2079
        %2328 = vmatprep.mubr.bf16.mxu0 %v1533
        %2329 = vmatmul.mubr.bf16.gmra.mrb[0].mxu0 %v1532
        %v2330 = vpop.f32.mrb[0].mxu0
        %v2331 = vadd.f32 %v2291, %v2330
        %v2332 = vpop.f32.mrb[0].mxu0
        %v2333 = vpop.f32.mrb[0].mxu0
        %v2334 = vpop.f32.mrb[0].mxu0
        %2335 = vdwg.mxu0
        %2336 = vmatprep.subr.bf16.mxu0 0
        %2337 = vmatpush1.bf16.msra.mxu0 %v2080
        %2338 = vmatprep.subr.bf16.mxu0 0
        %2339 = vmatpush1.bf16.msra.mxu0 %v2081
        %2340 = vmatprep.subr.bf16.mxu0 0
        %2341 = vmatpush1.bf16.msra.mxu0 %v2082
        %2342 = vmatprep.subr.bf16.mxu0 0
        %2343 = vmatpush1.bf16.msra.mxu0 %v2083
        %2344 = vmatprep.subr.bf16.mxu0 0
        %2345 = vmatpush1.bf16.msra.mxu0 %v2084
        %2346 = vmatprep.subr.bf16.mxu0 0
        %2347 = vmatpush1.bf16.msra.mxu0 %v2085
        %2348 = vmatprep.subr.bf16.mxu0 0
        %2349 = vmatpush1.bf16.msra.mxu0 %v2086
        %2350 = vmatprep.subr.bf16.mxu0 0
        %2351 = vmatpush1.bf16.msra.mxu0 %v2087
        %2352 = vmatprep.subr.bf16.mxu0 0
        %2353 = vmatpush1.bf16.msra.mxu0 %v2088
        %2354 = vmatprep.subr.bf16.mxu0 0
        %2355 = vmatpush1.bf16.msra.mxu0 %v2089
        %2356 = vmatprep.subr.bf16.mxu0 0
        %2357 = vmatpush1.bf16.msra.mxu0 %v2090
        %2358 = vmatprep.subr.bf16.mxu0 0
        %2359 = vmatpush1.bf16.msra.mxu0 %v2091
        %2360 = vmatprep.subr.bf16.mxu0 0
        %2361 = vmatpush1.bf16.msra.mxu0 %v2092
        %2362 = vmatprep.subr.bf16.mxu0 0
        %2363 = vmatpush1.bf16.msra.mxu0 %v2093
        %2364 = vmatprep.subr.bf16.mxu0 0
        %2365 = vmatpush1.bf16.msra.mxu0 %v2094
        %2366 = vmatprep.subr.bf16.mxu0 0
        %2367 = vmatpush1.bf16.msra.mxu0 %v2095
        %2368 = vmatprep.mubr.bf16.mxu0 %v1535
        %2369 = vmatmul.mubr.bf16.gmra.mrb[0].mxu0 %v1534
        %v2370 = vpop.f32.mrb[0].mxu0
        %v2371 = vadd.f32 %v2331, %v2370
        %v2372 = vpop.f32.mrb[0].mxu0
        %v2373 = vpop.f32.mrb[0].mxu0
        %v2374 = vpop.f32.mrb[0].mxu0
        %2375 = vdwg.mxu0
        %v2376 = vrot.slane %v2371, 4
        %v2377 = vadd.f32 %v2371, %v2376
        %v2378 = vrot.slane %v2377, 2
        %v2379 = vadd.f32 %v2377, %v2378
        %v2380 = vrot.slane %v2379, 1
        %v2381 = vadd.f32 %v2379, %v2380
        %v2382 = vld [vmem:[%s5] sm:$0x1]
        %v2383 = vadd.f32 %v2381, %v2382
        %v2384 = vlaneseq
        %v2385 = vshrl.u32 %v2384, 7
        %v2386 = vsub.s32 0, %v2385
        %v2387 = vrot.slane %v2383, %v2386
        %2388 = vst [vmem:[%s277] sm:$0xff] %v2387
      $region52: #{simple_card_classifier_forward.1} parent=43 // pred_fallthru
        _
      %p2389 = scmp.lt.s32.totalorder %s21, 1
      %s2390 = scalar_select %p2389, %s21, 1
      %s2391 = smul.addr %s2390, 8
      %s2392 = scalar_lea.vmem %s6, %s2391
      // Predicated region
      $region53: #{simple_card_classifier_forward.1} parent=43 // pred_check
        %p2393 = pneg %p180
      $region54: #{simple_card_classifier_forward.1} parent=43 // pred_check_branch
        %2395 = sbr.rel (%p2393) target = $region56
      $region55: #{simple_card_classifier_forward.1} parent=43 // pred_region
        _
      $region56: #{simple_card_classifier_forward.1} parent=43 // pred_fallthru
        _
    $region44: #{simple_card_classifier_forward.1} parent=5 // pred_fallthru
      _
    %p2396 = scmp.le.s32.totalorder 2, %s12
    // Predicated region
    $region57: #{simple_card_classifier_forward.1} parent=5 // pred_check
      %p2397 = pneg %p2396
    $region58: #{simple_card_classifier_forward.1} parent=5 // pred_check_branch
      %2399 = sbr.rel (%p2397) target = $region60
    $region59: #{simple_card_classifier_forward.1} parent=5 // pred_region
      %s2400 = ssub.s32 %s12, 2
      // Predicated region
      $region61: #{simple_card_classifier_forward.1} parent=59 // pred_check
        %p2401 = pneg %p186
      $region62: #{simple_card_classifier_forward.1} parent=59 // pred_check_branch
        %2403 = sbr.rel (%p2401) target = $region64
      $region63: #{simple_card_classifier_forward.1} parent=59 // pred_region
        %p2404 = scmp.lt.s32.totalorder %s23, 1
        %s2405 = scalar_select %p2404, %s23, 1
        %s2406 = smul.addr %s2405, 8
        %s2407 = scalar_lea.vmem %s6, %s2406
      $region64: #{simple_card_classifier_forward.1} parent=59 // pred_fallthru
        _
    $region60: #{simple_card_classifier_forward.1} parent=5 // pred_fallthru
      _
  $region6: #{simple_card_classifier_forward.1} parent=0 // loop_footer
    %s16 = sadd.s32 1, %s12
  $region7: #{simple_card_classifier_forward.1} parent=0 // loop_footer_branch
    %11 = sbr.rel target = $region3
  $region8: #{simple_card_classifier_forward.1} parent=0 // loop_exit
    _

</llo_original>
